<compile_context>
chip_gen: v7x
topology: tpu7x:2x2x1
jax: 0.10.0
libtpu: 0.0.40
codegen_flags: <defaults>
</compile_context>

<pallas_src>
import functools
import math

import jax
import jax.numpy as jnp
import numpy as np
from jax.experimental import pallas as pl
from jax.experimental.pallas import tpu as pltpu

LANE = 128


def _round_up(x, m):
    return (x + m - 1) // m * m


def _vmem_cap_bytes():
    try:
        cap = int(pltpu.get_tpu_info().vmem_capacity_bytes)
        if cap > 0:
            return cap
    except Exception:
        pass
    return 64 << 20  # conservative (v7x per-core VMEM)


# ----------------------------------------------------------------------------
# exact (erf-based) GELU, evaluated in-kernel
# ----------------------------------------------------------------------------
def _erf(z, approx_recip):
    # Abramowitz & Stegun 7.1.26, max abs error 1.5e-7 (exp lands on the EUP slot).
    a = jnp.abs(z)
    u = 1.0 + 0.3275911 * a
    t = pl.reciprocal(u, approx=True) if approx_recip else 1.0 / u
    poly = t * (0.254829592
                + t * (-0.284496736
                       + t * (1.421413741
                              + t * (-1.453152027 + t * 1.061405429))))
    r = 1.0 - poly * jnp.exp(-a * a)
    return jnp.where(z < 0, -r, r)


def _gelu(x, approx_recip):
    return 0.5 * x * (1.0 + _erf(x * 0.7071067811865476, approx_recip))


# ----------------------------------------------------------------------------
# Fused ConvBlock kernel: projector residual + GELU + conv1 + GELU + conv2 + add
# ----------------------------------------------------------------------------
def _conv_block_kernel(*refs, K, d, pad, TL, E, W, T, N, L, has_proj, chain,
                       mxu_dtype, approx_recip):
    if has_proj:
        (x_hbm, w1_ref, b1_ref, w2_ref, b2_ref, wp_ref, bp_ref,
         o_ref, xbuf, sem) = refs
    else:
        (x_hbm, w1_ref, b1_ref, w2_ref, b2_ref,
         o_ref, xbuf, sem) = refs
        wp_ref = bp_ref = None

    n = pl.program_id(0)
    t = pl.program_id(1)
    f32 = jnp.float32
    Cin = xbuf.shape[-1]
    Cout = o_ref.shape[-1]
    hl = 2 * pad              # halo rows left of the output tile
    hr = 2 * E - hl           # halo rows right of the output tile
    HE = TL + E               # rows of conv1 output / conv2 input window

    # ---- manual halo DMA, clipped at the sequence boundaries (static sizes per case) ----
    def dma(n_i, t_i, slot, start):
        n_i = jnp.asarray(n_i, jnp.int32)
        t_i = jnp.asarray(t_i, jnp.int32)

        def run(src_start, size, dst_start):
            cp = pltpu.make_async_copy(
                x_hbm.at[n_i, pl.ds(src_start, size), :],
                xbuf.at[slot, pl.ds(dst_start, size), :],
                sem.at[slot],
            )
            cp.start() if start else cp.wait()

        if T == 1:
            # single tile: both boundaries clipped, copy the whole (Lt == TL) sequence
            run(0, TL, hl)
        else:
            @pl.when(t_i == 0)
            def _():
                run(0, W - hl, hl)                     # left boundary clipped

            @pl.when(t_i == T - 1)
            def _():
                run(t_i * TL - hl, W - hr, 0)          # right boundary clipped

            if T > 2:
                @pl.when(jnp.logical_and(t_i > 0, t_i < T - 1))
                def _():
                    run(t_i * TL - hl, W, 0)           # interior: full haloed window

    if chain:
        # fully sequential grid (both axes "arbitrary"): chain the prefetch across rows
        g = n * T + t
        slot = g % 2

        @pl.when(jnp.logical_and(n == 0, t == 0))
        def _():
            dma(0, 0, 0, True)

        wrap = t + 1 == T
        t_nxt = jnp.where(wrap, 0, t + 1)
        n_nxt = jnp.where(wrap, n + 1, n)

        @pl.when(jnp.logical_or(t + 1 < T, n + 1 < N))
        def _():
            dma(n_nxt, t_nxt, (g + 1) % 2, True)

        dma(n, t, slot, False)
    else:
        # batch axis may be megacore-sharded: prime per row, prefetch within the row only
        slot = t % 2

        @pl.when(t == 0)
        def _():
            dma(n, 0, 0, True)

        @pl.when(t + 1 < T)
        def _():
            dma(n, t + 1, (t + 1) % 2, True)

        dma(n, t, slot, False)

    # ---- ConvBlock compute, fully in VMEM ----
    g0 = t * TL - hl                                           # global row of xbuf row 0
    xw = xbuf[slot].astype(f32)                                # (W, Cin)
    row_w = jax.lax.broadcasted_iota(jnp.int32, (W, 1), 0) + g0
    x_valid = jnp.logical_and(row_w >= 0, row_w < L)
    gw = jnp.where(x_valid, _gelu(xw, approx_recip), 0.0)      # gelu(x), zero outside [0, L)

    # conv1: fold the K dilated taps into one deep MXU contraction
    lhs1 = jnp.concatenate([gw[k * d:k * d + HE, :] for k in range(K)],
                           axis=1).astype(mxu_dtype)           # (HE, K*Cin)
    h = jnp.dot(lhs1, w1_ref[...], preferred_element_type=f32)
    h = h + b1_ref[...].astype(f32)
    row_h = jax.lax.broadcasted_iota(jnp.int32, (HE, 1), 0) + (t * TL - pad)
    h_valid = jnp.logical_and(row_h >= 0, row_h < L)
    hv = jnp.where(h_valid, _gelu(h, approx_recip), 0.0)       # conv2 sees zero-padded h

    # conv2, same folded contraction
    lhs2 = jnp.concatenate([hv[k * d:k * d + TL, :] for k in range(K)],
                           axis=1).astype(mxu_dtype)           # (TL, K*Cout)
    out = jnp.dot(lhs2, w2_ref[...], preferred_element_type=f32)
    out = out + b2_ref[...].astype(f32)

    # residual on the raw (un-GELUed) interior rows
    o_valid = x_valid[hl:hl + TL, :]
    x_int = jnp.where(o_valid, xw[hl:hl + TL, :], 0.0)
    if has_proj:
        res = jnp.dot(x_int.astype(mxu_dtype), wp_ref[...], preferred_element_type=f32)
        res = res + bp_ref[...].astype(f32)
    else:
        res = x_int

    # zero rows >= L so the carried (N, Lt, Cp) activation stays exactly zero there
    o_ref[0] = jnp.where(o_valid, out + res, 0.0).astype(o_ref.dtype)


# ----------------------------------------------------------------------------
# Host-side packing / sizing helpers
# ----------------------------------------------------------------------------
def _pack_w(w, ip, op, dtype):
    """(O, I, K) -> (K*ip, op), zero-padded channels, folded-K layout."""
    O, I, K = w.shape
    wt = jnp.transpose(w, (2, 1, 0))
    wt = jnp.pad(wt, ((0, 0), (0, ip - I), (0, op - O)))
    return wt.reshape(K * ip, op).astype(dtype)


def _pack_b(b, op):
    return jnp.pad(b.astype(jnp.float32), (0, op - b.shape[0])).reshape(1, op)


def _vmem_bytes(TL, E, W, K, Cinp, Coutp, act_it, mxu_it):
    HE = TL + E
    b = 2 * W * Cinp * act_it                     # xbuf: double-buffered halo window
    b += W * Cinp * 4                             # gelu(x) window temp (f32)
    b += HE * K * Cinp * mxu_it                   # folded conv1 LHS temp
    b += 2 * HE * Coutp * 4                       # conv1 out + gelu(h) temps (f32)
    b += TL * K * Coutp * mxu_it                  # folded conv2 LHS temp
    b += 2 * TL * Coutp * 4                       # conv2 out + residual temps (f32)
    b += 2 * TL * Coutp * act_it                  # double-buffered output block
    b += 2 * ((K * Cinp + K * Coutp + Cinp) * Coutp * mxu_it + 3 * Coutp * 4)  # weights x2
    return int(b)


def _choose_tl(L, E, tl_max, est_fn, budget):
    Lr = _round_up(max(L, 8), 8)
    if Lr <= tl_max or 2 * E >= tl_max:
        tl = Lr                                   # single tile over the whole sequence
    else:
        tl = min(_round_up(max(tl_max, 4 * E), 8), Lr)   # amortize the halo: TL >= 4*E
    floor = _round_up(max(2 * E + 8, 64), 8)
    while est_fn(tl) > budget and tl > floor:     # shrink to the VMEM budget
        tl = max(_round_up(max(tl // 2, 8), 8), floor)
    return tl


# ----------------------------------------------------------------------------
# One ConvBlock (fused pallas_call)
# ----------------------------------------------------------------------------
def conv_block_forward(x_nlc, blk, *, L, TL, T, mxu_dtype, batch_parallel, cap):
    """x_nlc: (N, Lt, Cinp) channels-last, Cinp multiple of 128, rows >= L and padded
    channels are exactly zero.  Returns (N, Lt, Coutp) with the same invariants."""
    N, Lt, Cinp = x_nlc.shape
    act_dtype = x_nlc.dtype
    d = int(blk["dilation"])
    w1, b1, w2, b2 = blk["w1"], blk["b1"], blk["w2"], blk["b2"]
    Cout, Cin, K = w1.shape
    Coutp = _round_up(Cout, LANE)

    rf = (K - 1) * d + 1
    pad = rf // 2                  # left zero pad of each conv (PyTorch SamePadConv)
    E = (K - 1) * d
    W = TL + 2 * E                 # haloed x window rows per tile (fused conv1+conv2)
    has_proj = blk["wp"] is not None
    if not has_proj:
        assert Cinp == Coutp, "identity residual requires matching padded channels"
    assert Lt == T * TL

    mxu_dtype = jnp.dtype(mxu_dtype)
    approx_recip = mxu_dtype == jnp.dtype(jnp.bfloat16)

    w1f = _pack_w(w1, Cinp, Coutp, mxu_dtype)      # (K*Cinp, Coutp)
    w2f = _pack_w(w2, Coutp, Coutp, mxu_dtype)     # (K*Coutp, Coutp)
    b1k, b2k = _pack_b(b1, Coutp), _pack_b(b2, Coutp)

    in_specs = [
        pl.BlockSpec(memory_space=pl.ANY),                          # x stays in HBM
        pl.BlockSpec((K * Cinp, Coutp), lambda n, t: (0, 0)),       # w1 (VMEM resident)
        pl.BlockSpec((1, Coutp), lambda n, t: (0, 0)),              # b1
        pl.BlockSpec((K * Coutp, Coutp), lambda n, t: (0, 0)),      # w2
        pl.BlockSpec((1, Coutp), lambda n, t: (0, 0)),              # b2
    ]
    args = [x_nlc, w1f, b1k, w2f, b2k]
    if has_proj:
        wpk = _pack_w(blk["wp"], Cinp, Coutp, mxu_dtype)            # (Cinp, Coutp)
        bpk = _pack_b(blk["bp"], Coutp)
        in_specs += [pl.BlockSpec((Cinp, Coutp), lambda n, t: (0, 0)),
                     pl.BlockSpec((1, Coutp), lambda n, t: (0, 0))]
        args += [wpk, bpk]

    est = _vmem_bytes(TL, E, W, K, Cinp, Coutp,
                      jnp.dtype(act_dtype).itemsize, mxu_dtype.itemsize)
    vmem_limit = min(max(int(est * 1.5) + (8 << 20), 32 << 20), int(cap * 0.9))

    chain = not batch_parallel
    kernel = functools.partial(_conv_block_kernel, K=K, d=d, pad=pad, TL=TL, E=E, W=W,
                               T=T, N=N, L=L, has_proj=has_proj, chain=chain,
                               mxu_dtype=mxu_dtype, approx_recip=approx_recip)

    out = pl.pallas_call(
        kernel,
        grid=(N, T),
        in_specs=in_specs,
        out_specs=pl.BlockSpec((1, TL, Coutp), lambda n, t: (n, t, 0)),
        out_shape=jax.ShapeDtypeStruct((N, Lt, Coutp), act_dtype),
        scratch_shapes=[
            pltpu.VMEM((2, W, Cinp), act_dtype),     # xbuf: haloed x, 2 slots
            pltpu.SemaphoreType.DMA((2,)),
        ],
        compiler_params=pltpu.CompilerParams(
            dimension_semantics=("arbitrary", "arbitrary") if chain
            else ("parallel", "arbitrary"),
            vmem_limit_bytes=vmem_limit,
        ),
    )(*args)
    return out


# ----------------------------------------------------------------------------
# Full encoder
# ----------------------------------------------------------------------------
def dilated_conv_encoder(x_ncl, params, *, tl_max=1024, compute_dtype=None,
                         batch_parallel=True):
    """DilatedConvEncoder forward.  x_ncl: (N, C, L) -> (N, channels[-1], L).

    compute_dtype=jnp.bfloat16 stages MXU operands and the carried activations in bf16
    (f32 accumulation); default None keeps the input dtype everywhere."""
    N, C, L = x_ncl.shape
    in_dtype = x_ncl.dtype
    act_dtype = jnp.dtype(in_dtype if compute_dtype is None else compute_dtype)
    mxu_dtype = act_dtype

    cap = _vmem_cap_bytes()
    budget = int(cap * 0.8)

    # per-block geometry (shared TL across blocks keeps the carried Lt consistent)
    metas, cin = [], C
    for blk in params:
        cout, _, K = blk["w1"].shape
        d = int(blk["dilation"])
        metas.append(dict(E=(K - 1) * d, K=K,
                          cinp=_round_up(cin, LANE), coutp=_round_up(cout, LANE)))
        cin = cout

    act_it = act_dtype.itemsize
    mxu_it = jnp.dtype(mxu_dtype).itemsize

    def est_for(m):
        return lambda tl: _vmem_bytes(tl, m["E"], tl + 2 * m["E"], m["K"],
                                      m["cinp"], m["coutp"], act_it, mxu_it)

    TL = min(_choose_tl(L, m["E"], tl_max, est_for(m), budget) for m in metas)
    E_max = max(m["E"] for m in metas)
    T = -(-L // TL)
    if T > 1 and TL <= 2 * E_max:          # multi-tile requires TL > 2*E for every block
        TL = _round_up(max(L, 8), 8)
        T = -(-L // TL)
    Lt = T * TL

    # Channels and sequence are padded ONCE at the encoder boundary; every block keeps the
    # invariant (rows >= L and padded channels stay exactly zero), so there are no per-block
    # pad / slice HBM round-trips.
    Cp = _round_up(C, LANE)
    x = jnp.transpose(x_ncl, (0, 2, 1)).astype(act_dtype)        # NCL -> NLC
    x = jnp.pad(x, ((0, 0), (0, Lt - L), (0, Cp - C)))

    for blk in params:
        x = conv_block_forward(x, blk, L=L, TL=TL, T=T, mxu_dtype=mxu_dtype,
                               batch_parallel=batch_parallel, cap=cap)

    cout = params[-1]["w1"].shape[0]
    return jnp.transpose(x[:, :L, :cout], (0, 2, 1)).astype(in_dtype)   # NLC -> NCL


# ----------------------------------------------------------------------------
# Deterministic parameter init (shapes follow nn.Conv1d in the PyTorch module)
# ----------------------------------------------------------------------------
def init_params(key, in_channels, channels, kernel_size):
    params = []
    cin = in_channels
    for i, cout in enumerate(channels):
        final = i == len(channels) - 1
        key, k0, k1, k2, k3, k4, k5 = jax.random.split(key, 7)

        def u(k, shape, fan_in):
            bound = 1.0 / math.sqrt(fan_in)
            return jax.random.uniform(k, shape, jnp.float32, -bound, bound)

        blk = {
            "dilation": 2 ** i,
            "w1": u(k0, (cout, cin, kernel_size), cin * kernel_size),
            "b1": u(k1, (cout,), cin * kernel_size),
            "w2": u(k2, (cout, cout, kernel_size), cout * kernel_size),
            "b2": u(k3, (cout,), cout * kernel_size),
        }
        if cin != cout or final:
            blk["wp"] = u(k4, (cout, cin, 1), cin)
            blk["bp"] = u(k5, (cout,), cin)
        else:
            blk["wp"] = None
            blk["bp"] = None
        params.append(blk)
        cin = cout
    return params


# ----------------------------------------------------------------------------
# Pure-JAX reference (mirrors the PyTorch forward exactly, NCL layout)
# ----------------------------------------------------------------------------
def _ref_same_pad_conv(x_ncl, w_oik, b, dilation):
    K = w_oik.shape[-1]
    rf = (K - 1) * dilation + 1
    pad = rf // 2
    out = jax.lax.conv_general_dilated(
        x_ncl, w_oik, window_strides=(1,), padding=[(pad, pad)],
        rhs_dilation=(dilation,), dimension_numbers=("NCH", "OIH", "NCH"),
    )
    out = out + b[None, :, None]
    if rf % 2 == 0:
        out = out[:, :, :-1]
    return out


def ref_forward(x_ncl, params):
    x = x_ncl
    for blk in params:
        if blk["wp"] is None:
            residual = x
        else:
            residual = _ref_same_pad_conv(x, blk["wp"], blk["bp"], 1)
        h = jax.nn.gelu(x, approximate=False)
        h = _ref_same_pad_conv(h, blk["w1"], blk["b1"], blk["dilation"])
        h = jax.nn.gelu(h, approximate=False)
        x = _ref_same_pad_conv(h, blk["w2"], blk["b2"], blk["dilation"]) + residual
    return x


# ----------------------------------------------------------------------------
if __name__ == "__main__":
    key = jax.random.PRNGKey(0)
    kx1, kx2, kp = jax.random.split(key, 3)

    kernel_size = 3
    channels = [8, 8, 16]              # per-block output channels (dilations 1, 2, 4)
    params = init_params(kp, 4, channels, kernel_size)

    # config 1: tiny sequence -> single L-tile per block
    N1, C1, L1 = 2, 4, 16
    x1 = jax.random.normal(kx1, (N1, C1, L1), jnp.float32)
    out1 = jax.block_until_ready(dilated_conv_encoder(x1, params))
    ref1 = jax.block_until_ready(ref_forward(x1, params))
    assert out1.shape == (N1, channels[-1], L1), out1.shape
    np.testing.assert_allclose(np.asarray(out1), np.asarray(ref1), rtol=2e-4, atol=2e-4)

    # config 2: longer ragged sequence -> multi-tile grid, boundary-clipped halo DMAs
    N2, C2, L2 = 2, 4, 100
    x2 = jax.random.normal(kx2, (N2, C2, L2), jnp.float32)
    ref2 = jax.block_until_ready(ref_forward(x2, params))
    out2 = jax.block_until_ready(dilated_conv_encoder(x2, params, tl_max=32))
    np.testing.assert_allclose(np.asarray(out2), np.asarray(ref2), rtol=2e-4, atol=2e-4)

    # config 3: fully sequential grid with the halo prefetch chained across batch rows
    out3 = jax.block_until_ready(
        dilated_conv_encoder(x2, params, tl_max=32, batch_parallel=False))
    np.testing.assert_allclose(np.asarray(out3), np.asarray(ref2), rtol=2e-4, atol=2e-4)

    # config 4: bf16-staged MXU operands / activations (fast MXU path), looser tolerance
    out4 = jax.block_until_ready(
        dilated_conv_encoder(x2, params, tl_max=32, compute_dtype=jnp.bfloat16))
    np.testing.assert_allclose(np.asarray(out4), np.asarray(ref2), rtol=1e-1, atol=1e-1)

    print("KERNEL_OK")
</pallas_src>

<mosaic_0001>
module attributes {stable_mosaic.version = 11 : i64} {
  func.func @_conv_block_kernel(%arg0: i32, %arg1: i32, %arg2: memref<2x16x128xf32, #tpu.memory_space<any>>, %arg3: memref<384x128xf32, #tpu.memory_space<vmem>>, %arg4: memref<1x128xf32, #tpu.memory_space<vmem>>, %arg5: memref<384x128xf32, #tpu.memory_space<vmem>>, %arg6: memref<1x128xf32, #tpu.memory_space<vmem>>, %arg7: memref<128x128xf32, #tpu.memory_space<vmem>>, %arg8: memref<1x128xf32, #tpu.memory_space<vmem>>, %arg9: memref<1x16x128xf32, #tpu.memory_space<vmem>>, %arg10: memref<2x20x128xf32, #tpu.memory_space<vmem>>, %arg11: memref<2x!tpu.dma_semaphore, #tpu.memory_space<semaphore_mem>>) attributes {dimension_semantics = [#tpu.dimension_semantics<parallel>, #tpu.dimension_semantics<arbitrary>], iteration_bounds = array<i64: 2, 1>, scalar_prefetch = 0 : i64, scratch_operands = 2 : i64, tpu.core_type = #tpu.core_type<tc>, window_params = [{}, {pipeline_mode = #tpu.pipeline_mode<synchronous>, transform_indices = @transform_1, window_bounds = array<i64: 384, 128>}, {pipeline_mode = #tpu.pipeline_mode<synchronous>, transform_indices = @transform_2, window_bounds = array<i64: 1, 128>}, {pipeline_mode = #tpu.pipeline_mode<synchronous>, transform_indices = @transform_3, window_bounds = array<i64: 384, 128>}, {pipeline_mode = #tpu.pipeline_mode<synchronous>, transform_indices = @transform_4, window_bounds = array<i64: 1, 128>}, {pipeline_mode = #tpu.pipeline_mode<synchronous>, transform_indices = @transform_5, window_bounds = array<i64: 128, 128>}, {pipeline_mode = #tpu.pipeline_mode<synchronous>, transform_indices = @transform_6, window_bounds = array<i64: 1, 128>}, {transform_indices = @transform_7, window_bounds = array<i64: 1, 16, 128>}]} {
    %c2_i32 = arith.constant 2 : i32
    %c0_i32 = arith.constant 0 : i32
    %0 = arith.cmpi eq, %c2_i32, %c0_i32 : i32
    %c1_i32 = arith.constant 1 : i32
    %1 = arith.select %0, %c1_i32, %c2_i32 : i32
    %2 = arith.remsi %arg1, %1 : i32
    %c0_i32_0 = arith.constant 0 : i32
    %3 = arith.cmpi ne, %2, %c0_i32_0 : i32
    %c0_i32_1 = arith.constant 0 : i32
    %4 = arith.cmpi slt, %2, %c0_i32_1 : i32
    %c0_i32_2 = arith.constant 0 : i32
    %5 = arith.cmpi slt, %1, %c0_i32_2 : i32
    %6 = arith.xori %4, %5 : i1
    %7 = arith.andi %6, %3 : i1
    %8 = arith.addi %2, %1 : i32
    %9 = arith.select %7, %8, %2 : i32
    %c0_i32_3 = arith.constant 0 : i32
    %10 = arith.cmpi eq, %arg1, %c0_i32_3 : i32
    %11 = arith.extui %10 : i1 to i32
    %c0_i32_4 = arith.constant 0 : i32
    %12 = arith.cmpi ne, %11, %c0_i32_4 : i32
    scf.if %12 {
      %c0_i32_71 = arith.constant 0 : i32
      %c0_i32_72 = arith.constant 0 : i32
      %c0_i32_73 = arith.constant 0 : i32
      %c0_i32_74 = arith.constant 0 : i32
      %171 = tpu.memref_slice %arg2[%arg0, %c0_i32_73, %c0_i32_74] : memref<2x16x128xf32, #tpu.memory_space<any>> -> memref<1x16x128xf32, #tpu.memory_space<any>>
      %172 = tpu.memref_squeeze %171 : memref<1x16x128xf32, #tpu.memory_space<any>> -> memref<16x128xf32, #tpu.memory_space<any>>
      %c2_i32_75 = arith.constant 2 : i32
      %c0_i32_76 = arith.constant 0 : i32
      %173 = tpu.memref_slice %arg10[%c0_i32_71, %c2_i32_75, %c0_i32_76] : memref<2x20x128xf32, #tpu.memory_space<vmem>> -> memref<1x16x128xf32, #tpu.memory_space<vmem>>
      %174 = tpu.memref_squeeze %173 : memref<1x16x128xf32, #tpu.memory_space<vmem>> -> memref<16x128xf32, #tpu.memory_space<vmem>>
      %175 = tpu.memref_slice %arg11[%c0_i32_72] : memref<2x!tpu.dma_semaphore, #tpu.memory_space<semaphore_mem>> -> memref<1x!tpu.dma_semaphore, #tpu.memory_space<semaphore_mem>>
      %176 = tpu.memref_squeeze %175 : memref<1x!tpu.dma_semaphore, #tpu.memory_space<semaphore_mem>> -> memref<!tpu.dma_semaphore, #tpu.memory_space<semaphore_mem>>
      tpu.enqueue_dma source(%172 : memref<16x128xf32, #tpu.memory_space<any>>) target(%174 : memref<16x128xf32, #tpu.memory_space<vmem>>) target_semaphore(%176 : memref<!tpu.dma_semaphore, #tpu.memory_space<semaphore_mem>>)
    } else {
    }
    %c1_i32_5 = arith.constant 1 : i32
    %13 = arith.addi %arg1, %c1_i32_5 : i32
    %c1_i32_6 = arith.constant 1 : i32
    %14 = arith.cmpi slt, %13, %c1_i32_6 : i32
    %15 = arith.extui %14 : i1 to i32
    %c0_i32_7 = arith.constant 0 : i32
    %16 = arith.cmpi ne, %15, %c0_i32_7 : i32
    scf.if %16 {
      %c1_i32_71 = arith.constant 1 : i32
      %171 = arith.addi %arg1, %c1_i32_71 : i32
      %c2_i32_72 = arith.constant 2 : i32
      %c0_i32_73 = arith.constant 0 : i32
      %172 = arith.cmpi eq, %c2_i32_72, %c0_i32_73 : i32
      %c1_i32_74 = arith.constant 1 : i32
      %173 = arith.select %172, %c1_i32_74, %c2_i32_72 : i32
      %174 = arith.remsi %171, %173 : i32
      %c0_i32_75 = arith.constant 0 : i32
      %175 = arith.cmpi ne, %174, %c0_i32_75 : i32
      %c0_i32_76 = arith.constant 0 : i32
      %176 = arith.cmpi slt, %174, %c0_i32_76 : i32
      %c0_i32_77 = arith.constant 0 : i32
      %177 = arith.cmpi slt, %173, %c0_i32_77 : i32
      %178 = arith.xori %176, %177 : i1
      %179 = arith.andi %178, %175 : i1
      %180 = arith.addi %174, %173 : i32
      %181 = arith.select %179, %180, %174 : i32
      %c0_i32_78 = arith.constant 0 : i32
      %c0_i32_79 = arith.constant 0 : i32
      %182 = tpu.memref_slice %arg2[%arg0, %c0_i32_78, %c0_i32_79] : memref<2x16x128xf32, #tpu.memory_space<any>> -> memref<1x16x128xf32, #tpu.memory_space<any>>
      %183 = tpu.memref_squeeze %182 : memref<1x16x128xf32, #tpu.memory_space<any>> -> memref<16x128xf32, #tpu.memory_space<any>>
      %c2_i32_80 = arith.constant 2 : i32
      %c0_i32_81 = arith.constant 0 : i32
      %184 = tpu.memref_slice %arg10[%181, %c2_i32_80, %c0_i32_81] : memref<2x20x128xf32, #tpu.memory_space<vmem>> -> memref<1x16x128xf32, #tpu.memory_space<vmem>>
      %185 = tpu.memref_squeeze %184 : memref<1x16x128xf32, #tpu.memory_space<vmem>> -> memref<16x128xf32, #tpu.memory_space<vmem>>
      %186 = tpu.memref_slice %arg11[%181] : memref<2x!tpu.dma_semaphore, #tpu.memory_space<semaphore_mem>> -> memref<1x!tpu.dma_semaphore, #tpu.memory_space<semaphore_mem>>
      %187 = tpu.memref_squeeze %186 : memref<1x!tpu.dma_semaphore, #tpu.memory_space<semaphore_mem>> -> memref<!tpu.dma_semaphore, #tpu.memory_space<semaphore_mem>>
      tpu.enqueue_dma source(%183 : memref<16x128xf32, #tpu.memory_space<any>>) target(%185 : memref<16x128xf32, #tpu.memory_space<vmem>>) target_semaphore(%187 : memref<!tpu.dma_semaphore, #tpu.memory_space<semaphore_mem>>)
    } else {
    }
    %c0_i32_8 = arith.constant 0 : i32
    %c0_i32_9 = arith.constant 0 : i32
    %17 = tpu.memref_slice %arg2[%arg0, %c0_i32_8, %c0_i32_9] : memref<2x16x128xf32, #tpu.memory_space<any>> -> memref<1x16x128xf32, #tpu.memory_space<any>>
    %18 = tpu.memref_squeeze %17 : memref<1x16x128xf32, #tpu.memory_space<any>> -> memref<16x128xf32, #tpu.memory_space<any>>
    %c2_i32_10 = arith.constant 2 : i32
    %c0_i32_11 = arith.constant 0 : i32
    %19 = tpu.memref_slice %arg10[%9, %c2_i32_10, %c0_i32_11] : memref<2x20x128xf32, #tpu.memory_space<vmem>> -> memref<1x16x128xf32, #tpu.memory_space<vmem>>
    %20 = tpu.memref_squeeze %19 : memref<1x16x128xf32, #tpu.memory_space<vmem>> -> memref<16x128xf32, #tpu.memory_space<vmem>>
    %21 = tpu.memref_slice %arg11[%9] : memref<2x!tpu.dma_semaphore, #tpu.memory_space<semaphore_mem>> -> memref<1x!tpu.dma_semaphore, #tpu.memory_space<semaphore_mem>>
    %22 = tpu.memref_squeeze %21 : memref<1x!tpu.dma_semaphore, #tpu.memory_space<semaphore_mem>> -> memref<!tpu.dma_semaphore, #tpu.memory_space<semaphore_mem>>
    tpu.wait_dma2 semaphore(%22 : memref<!tpu.dma_semaphore, #tpu.memory_space<semaphore_mem>>) src(%18 : memref<16x128xf32, #tpu.memory_space<any>>) dst(%20 : memref<16x128xf32, #tpu.memory_space<vmem>>)
    %c16_i32 = arith.constant 16 : i32
    %23 = arith.muli %arg1, %c16_i32 : i32
    %c2_i32_12 = arith.constant 2 : i32
    %24 = arith.subi %23, %c2_i32_12 : i32
    %25 = arith.index_cast %9 : i32 to index
    %c0 = arith.constant 0 : index
    %c0_13 = arith.constant 0 : index
    %26 = vector.load %arg10[%25, %c0, %c0_13] : memref<2x20x128xf32, #tpu.memory_space<vmem>>, vector<1x20x128xf32>
    %27 = vector.shape_cast %26 : vector<1x20x128xf32> to vector<20x128xf32>
    %28 = tpu.iota {dimensions = array<i32: 0>} : vector<20x1xi32>
    %29 = vector.broadcast %24 : i32 to vector<20x1xi32>
    %30 = arith.addi %28, %29 : vector<20x1xi32>
    %c0_i32_14 = arith.constant 0 : i32
    %31 = vector.broadcast %c0_i32_14 : i32 to vector<20x1xi32>
    %32 = arith.cmpi sge, %30, %31 : vector<20x1xi32>
    %c16_i32_15 = arith.constant 16 : i32
    %33 = vector.broadcast %c16_i32_15 : i32 to vector<20x1xi32>
    %34 = arith.cmpi slt, %30, %33 : vector<20x1xi32>
    %35 = arith.andi %32, %34 : vector<20x1xi1>
    %cst = arith.constant 5.000000e-01 : f32
    %36 = vector.broadcast %cst : f32 to vector<20x128xf32>
    %37 = arith.mulf %36, %27 : vector<20x128xf32>
    %cst_16 = arith.constant 0.707106769 : f32
    %38 = vector.broadcast %cst_16 : f32 to vector<20x128xf32>
    %39 = arith.mulf %27, %38 : vector<20x128xf32>
    %40 = math.absf %39 : vector<20x128xf32>
    %cst_17 = arith.constant 0.327591091 : f32
    %41 = vector.broadcast %cst_17 : f32 to vector<20x128xf32>
    %42 = arith.mulf %41, %40 : vector<20x128xf32>
    %cst_18 = arith.constant 1.000000e+00 : f32
    %43 = vector.broadcast %cst_18 : f32 to vector<20x128xf32>
    %44 = arith.addf %43, %42 : vector<20x128xf32>
    %cst_19 = arith.constant 1.000000e+00 : f32
    %45 = vector.broadcast %cst_19 : f32 to vector<20x128xf32>
    %46 = arith.divf %45, %44 : vector<20x128xf32>
    %cst_20 = arith.constant 1.06140542 : f32
    %47 = vector.broadcast %cst_20 : f32 to vector<20x128xf32>
    %48 = arith.mulf %46, %47 : vector<20x128xf32>
    %cst_21 = arith.constant -1.45315206 : f32
    %49 = vector.broadcast %cst_21 : f32 to vector<20x128xf32>
    %50 = arith.addf %49, %48 : vector<20x128xf32>
    %51 = arith.mulf %46, %50 : vector<20x128xf32>
    %cst_22 = arith.constant 1.42141378 : f32
    %52 = vector.broadcast %cst_22 : f32 to vector<20x128xf32>
    %53 = arith.addf %52, %51 : vector<20x128xf32>
    %54 = arith.mulf %46, %53 : vector<20x128xf32>
    %cst_23 = arith.constant -0.284496725 : f32
    %55 = vector.broadcast %cst_23 : f32 to vector<20x128xf32>
    %56 = arith.addf %55, %54 : vector<20x128xf32>
    %57 = arith.mulf %46, %56 : vector<20x128xf32>
    %cst_24 = arith.constant 0.254829586 : f32
    %58 = vector.broadcast %cst_24 : f32 to vector<20x128xf32>
    %59 = arith.addf %58, %57 : vector<20x128xf32>
    %60 = arith.mulf %46, %59 : vector<20x128xf32>
    %cst_25 = arith.constant 0.000000e+00 : f32
    %61 = vector.broadcast %cst_25 : f32 to vector<20x128xf32>
    %62 = arith.subf %61, %40 : vector<20x128xf32>
    %63 = arith.mulf %62, %40 : vector<20x128xf32>
    %64 = math.exp %63 : vector<20x128xf32>
    %65 = arith.mulf %60, %64 : vector<20x128xf32>
    %cst_26 = arith.constant 1.000000e+00 : f32
    %66 = vector.broadcast %cst_26 : f32 to vector<20x128xf32>
    %67 = arith.subf %66, %65 : vector<20x128xf32>
    %cst_27 = arith.constant 0.000000e+00 : f32
    %68 = vector.broadcast %cst_27 : f32 to vector<20x128xf32>
    %69 = arith.cmpf olt, %39, %68 : vector<20x128xf32>
    %cst_28 = arith.constant 0.000000e+00 : f32
    %70 = vector.broadcast %cst_28 : f32 to vector<20x128xf32>
    %71 = arith.subf %70, %67 : vector<20x128xf32>
    %72 = arith.select %69, %71, %67 : vector<20x128xi1>, vector<20x128xf32>
    %cst_29 = arith.constant 1.000000e+00 : f32
    %73 = vector.broadcast %cst_29 : f32 to vector<20x128xf32>
    %74 = arith.addf %73, %72 : vector<20x128xf32>
    %75 = arith.mulf %37, %74 : vector<20x128xf32>
    %cst_30 = arith.constant 0.000000e+00 : f32
    %76 = vector.shape_cast %35 : vector<20x1xi1> to vector<20x1xi1>
    %77 = vector.broadcast %76 : vector<20x1xi1> to vector<20x128xi1>
    %78 = vector.broadcast %cst_30 : f32 to vector<20x128xf32>
    %79 = arith.select %77, %75, %78 : vector<20x128xi1>, vector<20x128xf32>
    %80 = vector.extract_strided_slice %79 {offsets = [0, 0], sizes = [18, 128], strides = [1, 1]} : vector<20x128xf32> to vector<18x128xf32>
    %81 = vector.extract_strided_slice %79 {offsets = [1, 0], sizes = [18, 128], strides = [1, 1]} : vector<20x128xf32> to vector<18x128xf32>
    %82 = vector.extract_strided_slice %79 {offsets = [2, 0], sizes = [18, 128], strides = [1, 1]} : vector<20x128xf32> to vector<18x128xf32>
    %83 = tpu.concatenate %80, %81, %82 in 1 : vector<18x128xf32>, vector<18x128xf32>, vector<18x128xf32> -> vector<18x384xf32>
    %c0_31 = arith.constant 0 : index
    %c0_32 = arith.constant 0 : index
    %84 = vector.load %arg3[%c0_31, %c0_32] : memref<384x128xf32, #tpu.memory_space<vmem>>, vector<384x128xf32>
    %cst_33 = arith.constant dense<0.000000e+00> : vector<18x128xf32>
    %85 = tpu.matmul %83, %84, %cst_33 {dimension_numbers = #tpu.dot_dimension_numbers<[1], [0], [0], [1], [0, 0, 1, 1], [], []>} : vector<18x384xf32>, vector<384x128xf32>, vector<18x128xf32> -> vector<18x128xf32>
    %c0_34 = arith.constant 0 : index
    %c0_35 = arith.constant 0 : index
    %86 = vector.load %arg4[%c0_34, %c0_35] : memref<1x128xf32, #tpu.memory_space<vmem>>, vector<1x128xf32>
    %87 = vector.broadcast %86 : vector<1x128xf32> to vector<18x128xf32>
    %88 = arith.addf %85, %87 : vector<18x128xf32>
    %89 = tpu.iota {dimensions = array<i32: 0>} : vector<18x1xi32>
    %c16_i32_36 = arith.constant 16 : i32
    %90 = arith.muli %arg1, %c16_i32_36 : i32
    %c1_i32_37 = arith.constant 1 : i32
    %91 = arith.subi %90, %c1_i32_37 : i32
    %92 = vector.broadcast %91 : i32 to vector<18x1xi32>
    %93 = arith.addi %89, %92 : vector<18x1xi32>
    %c0_i32_38 = arith.constant 0 : i32
    %94 = vector.broadcast %c0_i32_38 : i32 to vector<18x1xi32>
    %95 = arith.cmpi sge, %93, %94 : vector<18x1xi32>
    %c16_i32_39 = arith.constant 16 : i32
    %96 = vector.broadcast %c16_i32_39 : i32 to vector<18x1xi32>
    %97 = arith.cmpi slt, %93, %96 : vector<18x1xi32>
    %98 = arith.andi %95, %97 : vector<18x1xi1>
    %cst_40 = arith.constant 5.000000e-01 : f32
    %99 = vector.broadcast %cst_40 : f32 to vector<18x128xf32>
    %100 = arith.mulf %99, %88 : vector<18x128xf32>
    %cst_41 = arith.constant 0.707106769 : f32
    %101 = vector.broadcast %cst_41 : f32 to vector<18x128xf32>
    %102 = arith.mulf %88, %101 : vector<18x128xf32>
    %103 = math.absf %102 : vector<18x128xf32>
    %cst_42 = arith.constant 0.327591091 : f32
    %104 = vector.broadcast %cst_42 : f32 to vector<18x128xf32>
    %105 = arith.mulf %104, %103 : vector<18x128xf32>
    %cst_43 = arith.constant 1.000000e+00 : f32
    %106 = vector.broadcast %cst_43 : f32 to vector<18x128xf32>
    %107 = arith.addf %106, %105 : vector<18x128xf32>
    %cst_44 = arith.constant 1.000000e+00 : f32
    %108 = vector.broadcast %cst_44 : f32 to vector<18x128xf32>
    %109 = arith.divf %108, %107 : vector<18x128xf32>
    %cst_45 = arith.constant 1.06140542 : f32
    %110 = vector.broadcast %cst_45 : f32 to vector<18x128xf32>
    %111 = arith.mulf %109, %110 : vector<18x128xf32>
    %cst_46 = arith.constant -1.45315206 : f32
    %112 = vector.broadcast %cst_46 : f32 to vector<18x128xf32>
    %113 = arith.addf %112, %111 : vector<18x128xf32>
    %114 = arith.mulf %109, %113 : vector<18x128xf32>
    %cst_47 = arith.constant 1.42141378 : f32
    %115 = vector.broadcast %cst_47 : f32 to vector<18x128xf32>
    %116 = arith.addf %115, %114 : vector<18x128xf32>
    %117 = arith.mulf %109, %116 : vector<18x128xf32>
    %cst_48 = arith.constant -0.284496725 : f32
    %118 = vector.broadcast %cst_48 : f32 to vector<18x128xf32>
    %119 = arith.addf %118, %117 : vector<18x128xf32>
    %120 = arith.mulf %109, %119 : vector<18x128xf32>
    %cst_49 = arith.constant 0.254829586 : f32
    %121 = vector.broadcast %cst_49 : f32 to vector<18x128xf32>
    %122 = arith.addf %121, %120 : vector<18x128xf32>
    %123 = arith.mulf %109, %122 : vector<18x128xf32>
    %cst_50 = arith.constant 0.000000e+00 : f32
    %124 = vector.broadcast %cst_50 : f32 to vector<18x128xf32>
    %125 = arith.subf %124, %103 : vector<18x128xf32>
    %126 = arith.mulf %125, %103 : vector<18x128xf32>
    %127 = math.exp %126 : vector<18x128xf32>
    %128 = arith.mulf %123, %127 : vector<18x128xf32>
    %cst_51 = arith.constant 1.000000e+00 : f32
    %129 = vector.broadcast %cst_51 : f32 to vector<18x128xf32>
    %130 = arith.subf %129, %128 : vector<18x128xf32>
    %cst_52 = arith.constant 0.000000e+00 : f32
    %131 = vector.broadcast %cst_52 : f32 to vector<18x128xf32>
    %132 = arith.cmpf olt, %102, %131 : vector<18x128xf32>
    %cst_53 = arith.constant 0.000000e+00 : f32
    %133 = vector.broadcast %cst_53 : f32 to vector<18x128xf32>
    %134 = arith.subf %133, %130 : vector<18x128xf32>
    %135 = arith.select %132, %134, %130 : vector<18x128xi1>, vector<18x128xf32>
    %cst_54 = arith.constant 1.000000e+00 : f32
    %136 = vector.broadcast %cst_54 : f32 to vector<18x128xf32>
    %137 = arith.addf %136, %135 : vector<18x128xf32>
    %138 = arith.mulf %100, %137 : vector<18x128xf32>
    %cst_55 = arith.constant 0.000000e+00 : f32
    %139 = vector.shape_cast %98 : vector<18x1xi1> to vector<18x1xi1>
    %140 = vector.broadcast %139 : vector<18x1xi1> to vector<18x128xi1>
    %141 = vector.broadcast %cst_55 : f32 to vector<18x128xf32>
    %142 = arith.select %140, %138, %141 : vector<18x128xi1>, vector<18x128xf32>
    %143 = vector.extract_strided_slice %142 {offsets = [0, 0], sizes = [16, 128], strides = [1, 1]} : vector<18x128xf32> to vector<16x128xf32>
    %144 = vector.extract_strided_slice %142 {offsets = [1, 0], sizes = [16, 128], strides = [1, 1]} : vector<18x128xf32> to vector<16x128xf32>
    %145 = vector.extract_strided_slice %142 {offsets = [2, 0], sizes = [16, 128], strides = [1, 1]} : vector<18x128xf32> to vector<16x128xf32>
    %146 = tpu.concatenate %143, %144, %145 in 1 : vector<16x128xf32>, vector<16x128xf32>, vector<16x128xf32> -> vector<16x384xf32>
    %c0_56 = arith.constant 0 : index
    %c0_57 = arith.constant 0 : index
    %147 = vector.load %arg5[%c0_56, %c0_57] : memref<384x128xf32, #tpu.memory_space<vmem>>, vector<384x128xf32>
    %cst_58 = arith.constant dense<0.000000e+00> : vector<16x128xf32>
    %148 = tpu.matmul %146, %147, %cst_58 {dimension_numbers = #tpu.dot_dimension_numbers<[1], [0], [0], [1], [0, 0, 1, 1], [], []>} : vector<16x384xf32>, vector<384x128xf32>, vector<16x128xf32> -> vector<16x128xf32>
    %c0_59 = arith.constant 0 : index
    %c0_60 = arith.constant 0 : index
    %149 = vector.load %arg6[%c0_59, %c0_60] : memref<1x128xf32, #tpu.memory_space<vmem>>, vector<1x128xf32>
    %150 = vector.broadcast %149 : vector<1x128xf32> to vector<16x128xf32>
    %151 = arith.addf %148, %150 : vector<16x128xf32>
    %152 = vector.extract_strided_slice %35 {offsets = [2, 0], sizes = [16, 1], strides = [1, 1]} : vector<20x1xi1> to vector<16x1xi1>
    %153 = vector.extract_strided_slice %27 {offsets = [2, 0], sizes = [16, 128], strides = [1, 1]} : vector<20x128xf32> to vector<16x128xf32>
    %cst_61 = arith.constant 0.000000e+00 : f32
    %154 = vector.shape_cast %152 : vector<16x1xi1> to vector<16x1xi1>
    %155 = vector.broadcast %154 : vector<16x1xi1> to vector<16x128xi1>
    %156 = vector.broadcast %cst_61 : f32 to vector<16x128xf32>
    %157 = arith.select %155, %153, %156 : vector<16x128xi1>, vector<16x128xf32>
    %c0_62 = arith.constant 0 : index
    %c0_63 = arith.constant 0 : index
    %158 = vector.load %arg7[%c0_62, %c0_63] : memref<128x128xf32, #tpu.memory_space<vmem>>, vector<128x128xf32>
    %cst_64 = arith.constant dense<0.000000e+00> : vector<16x128xf32>
    %159 = tpu.matmul %157, %158, %cst_64 {dimension_numbers = #tpu.dot_dimension_numbers<[1], [0], [0], [1], [0, 0, 1, 1], [], []>} : vector<16x128xf32>, vector<128x128xf32>, vector<16x128xf32> -> vector<16x128xf32>
    %c0_65 = arith.constant 0 : index
    %c0_66 = arith.constant 0 : index
    %160 = vector.load %arg8[%c0_65, %c0_66] : memref<1x128xf32, #tpu.memory_space<vmem>>, vector<1x128xf32>
    %161 = vector.broadcast %160 : vector<1x128xf32> to vector<16x128xf32>
    %162 = arith.addf %159, %161 : vector<16x128xf32>
    %163 = arith.addf %151, %162 : vector<16x128xf32>
    %cst_67 = arith.constant 0.000000e+00 : f32
    %164 = vector.shape_cast %152 : vector<16x1xi1> to vector<16x1xi1>
    %165 = vector.broadcast %164 : vector<16x1xi1> to vector<16x128xi1>
    %166 = vector.broadcast %cst_67 : f32 to vector<16x128xf32>
    %167 = arith.select %165, %163, %166 : vector<16x128xi1>, vector<16x128xf32>
    %c0_68 = arith.constant 0 : index
    %c0_69 = arith.constant 0 : index
    %c0_70 = arith.constant 0 : index
    %168 = vector.load %arg9[%c0_68, %c0_69, %c0_70] : memref<1x16x128xf32, #tpu.memory_space<vmem>>, vector<1x16x128xf32>
    %169 = vector.shape_cast %168 : vector<1x16x128xf32> to vector<16x128xf32>
    %170 = vector.shape_cast %167 : vector<16x128xf32> to vector<1x16x128xf32>
    tpu.vector_store %arg9[%c0_68, %c0_69, %c0_70], %170 {strides = array<i32>} : memref<1x16x128xf32, #tpu.memory_space<vmem>>, vector<1x16x128xf32>,
    return
  }
  func.func @transform_1(%arg0: i32, %arg1: i32) -> (i32, i32) {
    %c0_i32 = arith.constant 0 : i32
    %c0_i32_0 = arith.constant 0 : i32
    %c0_i32_1 = arith.constant 0 : i32
    return %c0_i32, %c0_i32_0 : i32, i32
  }
  func.func @transform_2(%arg0: i32, %arg1: i32) -> (i32, i32) {
    %c0_i32 = arith.constant 0 : i32
    %c0_i32_0 = arith.constant 0 : i32
    %c0_i32_1 = arith.constant 0 : i32
    return %c0_i32, %c0_i32_0 : i32, i32
  }
  func.func @transform_3(%arg0: i32, %arg1: i32) -> (i32, i32) {
    %c0_i32 = arith.constant 0 : i32
    %c0_i32_0 = arith.constant 0 : i32
    %c0_i32_1 = arith.constant 0 : i32
    return %c0_i32, %c0_i32_0 : i32, i32
  }
  func.func @transform_4(%arg0: i32, %arg1: i32) -> (i32, i32) {
    %c0_i32 = arith.constant 0 : i32
    %c0_i32_0 = arith.constant 0 : i32
    %c0_i32_1 = arith.constant 0 : i32
    return %c0_i32, %c0_i32_0 : i32, i32
  }
  func.func @transform_5(%arg0: i32, %arg1: i32) -> (i32, i32) {
    %c0_i32 = arith.constant 0 : i32
    %c0_i32_0 = arith.constant 0 : i32
    %c0_i32_1 = arith.constant 0 : i32
    return %c0_i32, %c0_i32_0 : i32, i32
  }
  func.func @transform_6(%arg0: i32, %arg1: i32) -> (i32, i32) {
    %c0_i32 = arith.constant 0 : i32
    %c0_i32_0 = arith.constant 0 : i32
    %c0_i32_1 = arith.constant 0 : i32
    return %c0_i32, %c0_i32_0 : i32, i32
  }
  func.func @transform_7(%arg0: i32, %arg1: i32) -> (i32, i32, i32) {
    %c0_i32 = arith.constant 0 : i32
    %c0_i32_0 = arith.constant 0 : i32
    return %arg0, %arg1, %c0_i32 : i32, i32, i32
  }
}

</mosaic_0001>

<llo_original>
// kernel: tpu_custom_call.1
$region0: #{tpu_custom_call.1}
  #allocation0 [shape = 'u32[]', space=smem, size = 0x4, offset = 0x4, fixed_abs, tag = 'smem constant byte address 0x4 - core index']
  #allocation1 [shape = 'u32[144,128]{1,0:T(1,128)}', space=vmem, size = 0x12000, scoped, tag = 'internal scratch']
  #allocation2 [shape = 'f32[2,20,128]{2,1,0:T(8,128)}', space=vmem, size = 0x6000, scoped, tag = 'scratch operand']
  #allocation3 [shape = 's32[2]{0}', space=sflag, size = 0x8, scoped, tag = 'scratch operand']
  #allocation11 [shape = 's32[]', space=sflag, size = 0x4, offset = 0, fixed_abs, tag = 'sflag constant byte address 0x0 - dummy sync flag']
  #allocation12 [shape = 's32[]', space=sflag, size = 0x4, offset = 0, fixed_abs, tag = 'sflag constant byte address 0x0 - dummy sync flag']
  #allocation13 [shape = 'u32[]', space=smem, size = 0x4, offset = 0x44, fixed_abs, tag = 'smem constant byte address 0x44 - assertion arg 0']
  #allocation14 [shape = 'u32[]', space=smem, size = 0x4, offset = 0x48, fixed_abs, tag = 'smem constant byte address 0x48 - assertion arg 1']
  #allocation15 [shape = 's32[]', space=sflag, size = 0x4, offset = 0, fixed_abs, tag = 'sflag constant byte address 0x0 - dummy sync flag']
  #allocation16 [shape = 's32[]', space=sflag, size = 0x4, offset = 0, fixed_abs, tag = 'sflag constant byte address 0x0 - dummy sync flag']
  %s0 = inlined_call_operand.hbm [shape: f32[2,16,128], index: 0, kind: input, shape index: {}]
  %s1 = inlined_call_operand.hbm [shape: f32[384,128], index: 1, kind: input, shape index: {}]
  %s2 = inlined_call_operand.vmem [shape: f32[1,128], index: 2, kind: input, shape index: {}]
  %s3 = inlined_call_operand.hbm [shape: f32[384,128], index: 3, kind: input, shape index: {}]
  %s4 = inlined_call_operand.vmem [shape: f32[1,128], index: 4, kind: input, shape index: {}]
  %s5 = inlined_call_operand.hbm [shape: f32[128,128], index: 5, kind: input, shape index: {}]
  %s6 = inlined_call_operand.vmem [shape: f32[1,128], index: 6, kind: input, shape index: {}]
  %s7 = inlined_call_operand.hbm [shape: f32[2,16,128], index: 7, kind: output, shape index: {}]
  %s8 = sld [smem:[#allocation0]]
  $region85: #{tpu_custom_call.1} parent=0
    _
  %s10 = ssub.s32 1, %s8
  %s11 = scalar_select 0, %s10, %s8
  $region1: #{tpu_custom_call.1} parent=0
    #allocation4 [shape = 'u8[196608]{0}', space=vmem, size = 0x30000, scoped, tag = 'input window, operand 1, single buffered']
    #allocation5 [shape = 's32[2]{0}', space=sflag, size = 0x8, scoped, tag = 'scoped memory for tpu_custom_call.1']
    #allocation6 [shape = 's32[2]{0}', space=sflag, size = 0x8, scoped, tag = 'scoped memory for tpu_custom_call.1']
    #allocation7 [shape = 'u8[196608]{0}', space=vmem, size = 0x30000, scoped, tag = 'input window, operand 3, single buffered']
    #allocation8 [shape = 's32[1]{0}', space=sflag, size = 0x4, scoped, tag = 'scoped memory for tpu_custom_call.1']
    #allocation9 [shape = 'u8[65536]{0}', space=vmem, size = 0x10000, scoped, tag = 'input window, operand 5, single buffered']
    #allocation10 [shape = 'u8[16384]{0}', space=vmem, size = 0x4000, scoped, tag = 'output window, operand 0']
    %12 = vsyncpa [#allocation5], 0
    %13 = vsyncpa [#allocation8], 0
    %14 = vsyncpa [#allocation6], 0
    %s15 = scalar_lea.sflag [#allocation6], 1
    %16 = vsyncpa %s15, 0
    loop: start=0, step=1, limit=4
    $region2: #{tpu_custom_call.1} parent=1 // loop_pre_header
      _
    $region3: #{tpu_custom_call.1} parent=1 // loop_header
      %s18 = sphi 0, %s22
      %p19 = scmp.ge.s32.totalorder %s18, 4
      %s25 = sphi 0, %s37
      %s26 = sphi 0, %s33
      %s27 = sphi 0, %s25
      %s28 = sphi 0, %s26
      %s29 = sphi 0, %s27
      %s30 = sphi 0, %s28
      %s38 = sphi 0, %s38
      %s40 = sphi 0, %s38
      %s41 = sphi 0, %s40
      %s55 = sphi 0, %s41
      %s59 = sphi 0, %s59
      %s61 = sphi 0, %s59
      %s62 = sphi 0, %s61
      %s76 = sphi 0, %s62
      %s80 = sphi 0, %s80
      %s82 = sphi 0, %s80
      %s83 = sphi 0, %s82
      %s97 = sphi 0, %s83
      %s101 = sphi 0, %s101
      %s103 = sphi 0, %s101
      %s104 = sphi 0, %s103
      %s118 = sphi 0, %s104
      %s122 = sphi 0, %s122
      %s124 = sphi 0, %s122
      %s125 = sphi 0, %s124
      %s139 = sphi 0, %s125
      %s143 = sphi 0, %s143
      %s145 = sphi 0, %s143
      %s146 = sphi 0, %s145
      %s160 = sphi 0, %s146
      %s168 = sphi 0, %s170
      %s171 = sphi 0, %s168
      %s172 = sphi 0, %s171
      %s188 = sphi 0, %s172
    $region4: #{tpu_custom_call.1} parent=1 // loop_header_branch
      %21 = sbr.rel (%p19) target = $region8
    $region5: #{tpu_custom_call.1} parent=1 // loop_body
      %s23 = ssub.s32 %s18, 1
      %s24 = ssub.s32 %s18, 2
      %s31 = sadd.s32 1, %s26
      %p32 = scmp.ge.s32.totalorder %s31, 1
      %s33 = scalar_select %p32, 0, %s31
      %s34 = sadd.s32 1, %s25
      %s35 = scalar_select %p32, %s34, %s25
      %p36 = scmp.ge.s32.totalorder %s35, 2
      %s37 = scalar_select %p36, 0, %s35
      %s39 = sadd.s32 %s38, 1
      %p42 = scmp.eq.s32.totalorder %s18, 1
      %p43 = scmp.ne.s32.totalorder %s38, %s40
      %p44 = scmp.eq.s32.totalorder %s18, 0
      %p45 = por %p43, %p44
      %p46 = scmp.ne.s32.totalorder %s38, %s40
      %p47 = scmp.eq.s32.totalorder %s23, 1
      %p48 = por %p46, %p47
      %p49 = scmp.ne.s32.totalorder %s40, %s41
      %p50 = scmp.eq.s32.totalorder %s23, 0
      %p51 = por %p49, %p50
      %p52 = scmp.ne.s32.totalorder %s40, %s41
      %p53 = scmp.eq.s32.totalorder %s24, 1
      %p54 = por %p52, %p53
      %p56 = scmp.ne.s32.totalorder %s41, %s55
      %p57 = scmp.eq.s32.totalorder %s24, 0
      %p58 = por %p56, %p57
      %s60 = sadd.s32 %s59, 1
      %p63 = scmp.eq.s32.totalorder %s18, 1
      %p64 = scmp.ne.s32.totalorder %s59, %s61
      %p65 = scmp.eq.s32.totalorder %s18, 0
      %p66 = por %p64, %p65
      %p67 = scmp.ne.s32.totalorder %s59, %s61
      %p68 = scmp.eq.s32.totalorder %s23, 1
      %p69 = por %p67, %p68
      %p70 = scmp.ne.s32.totalorder %s61, %s62
      %p71 = scmp.eq.s32.totalorder %s23, 0
      %p72 = por %p70, %p71
      %p73 = scmp.ne.s32.totalorder %s61, %s62
      %p74 = scmp.eq.s32.totalorder %s24, 1
      %p75 = por %p73, %p74
      %p77 = scmp.ne.s32.totalorder %s62, %s76
      %p78 = scmp.eq.s32.totalorder %s24, 0
      %p79 = por %p77, %p78
      %s81 = sadd.s32 %s80, 1
      %p84 = scmp.eq.s32.totalorder %s18, 1
      %p85 = scmp.ne.s32.totalorder %s80, %s82
      %p86 = scmp.eq.s32.totalorder %s18, 0
      %p87 = por %p85, %p86
      %p88 = scmp.ne.s32.totalorder %s80, %s82
      %p89 = scmp.eq.s32.totalorder %s23, 1
      %p90 = por %p88, %p89
      %p91 = scmp.ne.s32.totalorder %s82, %s83
      %p92 = scmp.eq.s32.totalorder %s23, 0
      %p93 = por %p91, %p92
      %p94 = scmp.ne.s32.totalorder %s82, %s83
      %p95 = scmp.eq.s32.totalorder %s24, 1
      %p96 = por %p94, %p95
      %p98 = scmp.ne.s32.totalorder %s83, %s97
      %p99 = scmp.eq.s32.totalorder %s24, 0
      %p100 = por %p98, %p99
      %s102 = sadd.s32 %s101, 1
      %p105 = scmp.eq.s32.totalorder %s18, 1
      %p106 = scmp.ne.s32.totalorder %s101, %s103
      %p107 = scmp.eq.s32.totalorder %s18, 0
      %p108 = por %p106, %p107
      %p109 = scmp.ne.s32.totalorder %s101, %s103
      %p110 = scmp.eq.s32.totalorder %s23, 1
      %p111 = por %p109, %p110
      %p112 = scmp.ne.s32.totalorder %s103, %s104
      %p113 = scmp.eq.s32.totalorder %s23, 0
      %p114 = por %p112, %p113
      %p115 = scmp.ne.s32.totalorder %s103, %s104
      %p116 = scmp.eq.s32.totalorder %s24, 1
      %p117 = por %p115, %p116
      %p119 = scmp.ne.s32.totalorder %s104, %s118
      %p120 = scmp.eq.s32.totalorder %s24, 0
      %p121 = por %p119, %p120
      %s123 = sadd.s32 %s122, 1
      %p126 = scmp.eq.s32.totalorder %s18, 1
      %p127 = scmp.ne.s32.totalorder %s122, %s124
      %p128 = scmp.eq.s32.totalorder %s18, 0
      %p129 = por %p127, %p128
      %p130 = scmp.ne.s32.totalorder %s122, %s124
      %p131 = scmp.eq.s32.totalorder %s23, 1
      %p132 = por %p130, %p131
      %p133 = scmp.ne.s32.totalorder %s124, %s125
      %p134 = scmp.eq.s32.totalorder %s23, 0
      %p135 = por %p133, %p134
      %p136 = scmp.ne.s32.totalorder %s124, %s125
      %p137 = scmp.eq.s32.totalorder %s24, 1
      %p138 = por %p136, %p137
      %p140 = scmp.ne.s32.totalorder %s125, %s139
      %p141 = scmp.eq.s32.totalorder %s24, 0
      %p142 = por %p140, %p141
      %s144 = sadd.s32 %s143, 1
      %p147 = scmp.eq.s32.totalorder %s18, 1
      %p148 = scmp.ne.s32.totalorder %s143, %s145
      %p149 = scmp.eq.s32.totalorder %s18, 0
      %p150 = por %p148, %p149
      %p151 = scmp.ne.s32.totalorder %s143, %s145
      %p152 = scmp.eq.s32.totalorder %s23, 1
      %p153 = por %p151, %p152
      %p154 = scmp.ne.s32.totalorder %s145, %s146
      %p155 = scmp.eq.s32.totalorder %s23, 0
      %p156 = por %p154, %p155
      %p157 = scmp.ne.s32.totalorder %s145, %s146
      %p158 = scmp.eq.s32.totalorder %s24, 1
      %p159 = por %p157, %p158
      %p161 = scmp.ne.s32.totalorder %s146, %s160
      %p162 = scmp.eq.s32.totalorder %s24, 0
      %p163 = por %p161, %p162
      %s164 = ssub.s32 %s25, %s37
      %s165 = ssub.s32 %s26, %s33
      %s166 = sor.u32 %s164, %s165
      %p167 = scmp.eq.s32.totalorder %s166, 0
      %s169 = sadd.s32 %s168, 1
      %s170 = scalar_select %p167, %s168, %s169
      %p173 = pneg %p167
      %p174 = scmp.eq.s32.totalorder %s18, 1
      %p175 = por %p173, %p174
      %p176 = scmp.ne.s32.totalorder %s168, %s171
      %p177 = scmp.eq.s32.totalorder %s18, 0
      %p178 = por %p176, %p177
      %p179 = scmp.ne.s32.totalorder %s168, %s171
      %p180 = scmp.eq.s32.totalorder %s23, 1
      %p181 = por %p179, %p180
      %p182 = scmp.ne.s32.totalorder %s171, %s172
      %p183 = scmp.eq.s32.totalorder %s23, 0
      %p184 = por %p182, %p183
      %p185 = scmp.ne.s32.totalorder %s171, %s172
      %p186 = scmp.eq.s32.totalorder %s24, 1
      %p187 = por %p185, %p186
      %p189 = scmp.ne.s32.totalorder %s172, %s188
      %p190 = scmp.eq.s32.totalorder %s24, 0
      %p191 = por %p189, %p190
      %p192 = scmp.le.s32.totalorder 1, %s18
      %p193 = scmp.lt.s32.totalorder %s18, 3
      %p194 = pnand %p192, %p193
      %p195 = pneg %p194
      // Predicated region
      $region9: #{tpu_custom_call.1} parent=5 // pred_check
        _
      $region10: #{tpu_custom_call.1} parent=5 // pred_check_branch
        %197 = sbr.rel (%p194) target = $region12
      $region11: #{tpu_custom_call.1} parent=5 // pred_region
        %s198 = ssub.s32 %s18, 1
        // Predicated region
        $region13: #{tpu_custom_call.1} parent=11 // pred_check
          %p199 = pneg %p51
        $region14: #{tpu_custom_call.1} parent=11 // pred_check_branch
          %201 = sbr.rel (%p199) target = $region16
        $region15: #{tpu_custom_call.1} parent=11 // pred_region
          %s203 = ssub.s32 6144, 6144
          %204 = vsyncadd [#allocation5], %s203
          %s205 = sshll.u32 [#allocation4], 4
          %s206 = int_to_ptr.vmem [resolvable:$true] %s205
          %211 = dma.hbm_to_vmem [thread:$0]  %s1, 6144, %s206, [#allocation5], 128, 128, 8
        $region16: #{tpu_custom_call.1} parent=11 // pred_fallthru
          _
        // Predicated region
        $region17: #{tpu_custom_call.1} parent=11 // pred_check
          %p212 = pneg %p72
        $region18: #{tpu_custom_call.1} parent=11 // pred_check_branch
          %214 = sbr.rel (%p212) target = $region20
        $region19: #{tpu_custom_call.1} parent=11 // pred_region
          _
        $region20: #{tpu_custom_call.1} parent=11 // pred_fallthru
          _
        // Predicated region
        $region21: #{tpu_custom_call.1} parent=11 // pred_check
          %p215 = pneg %p93
        $region22: #{tpu_custom_call.1} parent=11 // pred_check_branch
          %217 = sbr.rel (%p215) target = $region24
        $region23: #{tpu_custom_call.1} parent=11 // pred_region
          %s219 = ssub.s32 6144, 6144
          %220 = vsyncadd [#allocation8], %s219
          %s221 = sshll.u32 [#allocation7], 4
          %s222 = int_to_ptr.vmem [resolvable:$true] %s221
          %227 = dma.hbm_to_vmem [thread:$0]  %s3, 6144, %s222, [#allocation8], 128, 128, 8
        $region24: #{tpu_custom_call.1} parent=11 // pred_fallthru
          _
        // Predicated region
        $region25: #{tpu_custom_call.1} parent=11 // pred_check
          %p228 = pneg %p114
        $region26: #{tpu_custom_call.1} parent=11 // pred_check_branch
          %230 = sbr.rel (%p228) target = $region28
        $region27: #{tpu_custom_call.1} parent=11 // pred_region
          _
        $region28: #{tpu_custom_call.1} parent=11 // pred_fallthru
          _
        // Predicated region
        $region29: #{tpu_custom_call.1} parent=11 // pred_check
          %p231 = pneg %p135
        $region30: #{tpu_custom_call.1} parent=11 // pred_check_branch
          %233 = sbr.rel (%p231) target = $region32
        $region31: #{tpu_custom_call.1} parent=11 // pred_region
          %s235 = ssub.s32 2048, 2048
          %236 = vsyncadd [#allocation8], %s235
          %s237 = sshll.u32 [#allocation9], 4
          %s238 = int_to_ptr.vmem [resolvable:$true] %s237
          %243 = dma.hbm_to_vmem [thread:$0]  %s5, 2048, %s238, [#allocation8], 128, 128, 8
        $region32: #{tpu_custom_call.1} parent=11 // pred_fallthru
          _
        // Predicated region
        $region33: #{tpu_custom_call.1} parent=11 // pred_check
          %p244 = pneg %p156
        $region34: #{tpu_custom_call.1} parent=11 // pred_check_branch
          %246 = sbr.rel (%p244) target = $region36
        $region35: #{tpu_custom_call.1} parent=11 // pred_region
          _
        $region36: #{tpu_custom_call.1} parent=11 // pred_fallthru
          _
      $region12: #{tpu_custom_call.1} parent=5 // pred_fallthru
        _
      %p247 = scmp.lt.s32.totalorder %s18, 2
      // Predicated region
      $region37: #{tpu_custom_call.1} parent=5 // pred_check
        %p248 = pneg %p247
      $region38: #{tpu_custom_call.1} parent=5 // pred_check_branch
        %250 = sbr.rel (%p248) target = $region40
      $region39: #{tpu_custom_call.1} parent=5 // pred_region
        _
      $region40: #{tpu_custom_call.1} parent=5 // pred_fallthru
        _
      %p251 = scmp.le.s32.totalorder 1, %s18
      %p252 = scmp.lt.s32.totalorder %s18, 3
      %p253 = pnand %p251, %p252
      %p254 = pneg %p253
      // Predicated region
      $region41: #{tpu_custom_call.1} parent=5 // pred_check
        _
      $region42: #{tpu_custom_call.1} parent=5 // pred_check_branch
        %256 = sbr.rel (%p253) target = $region44
      $region43: #{tpu_custom_call.1} parent=5 // pred_region
        %s257 = ssub.s32 %s18, 1
        // Predicated region
        $region45: #{tpu_custom_call.1} parent=43 // pred_check
          %p258 = pneg %p51
        $region46: #{tpu_custom_call.1} parent=43 // pred_check_branch
          %260 = sbr.rel (%p258) target = $region48
        $region47: #{tpu_custom_call.1} parent=43 // pred_region
          %261 = dma.done [#allocation5], 6144
        $region48: #{tpu_custom_call.1} parent=43 // pred_fallthru
          _
        // Predicated region
        $region49: #{tpu_custom_call.1} parent=43 // pred_check
          %p262 = pneg %p93
        $region50: #{tpu_custom_call.1} parent=43 // pred_check_branch
          %264 = sbr.rel (%p262) target = $region52
        $region51: #{tpu_custom_call.1} parent=43 // pred_region
          %265 = dma.done [#allocation8], 6144
        $region52: #{tpu_custom_call.1} parent=43 // pred_fallthru
          _
        // Predicated region
        $region53: #{tpu_custom_call.1} parent=43 // pred_check
          %p266 = pneg %p135
        $region54: #{tpu_custom_call.1} parent=43 // pred_check_branch
          %268 = sbr.rel (%p266) target = $region56
        $region55: #{tpu_custom_call.1} parent=43 // pred_region
          %269 = dma.done [#allocation8], 2048
        $region56: #{tpu_custom_call.1} parent=43 // pred_fallthru
          _
        %p270 = pneg %p51
        %p271 = pneg %p48
        %p272 = pneg %p72
        %p273 = pneg %p69
        %p274 = pneg %p93
        %p275 = pneg %p90
        %p276 = pneg %p114
        %p277 = pneg %p111
        %p278 = pneg %p135
        %p279 = pneg %p132
        %p280 = pneg %p156
        %p281 = pneg %p153
        %p282 = pneg %p184
        %p283 = pneg %p181
        %s284 = sand.u32 %s171, 1
        %s285 = scalar_lea.sflag [#allocation6], %s284
        %s286 = sand.u32 %s171, 1
        %s287 = smul.addr %s286, 16
        %s288 = scalar_lea.vmem [#allocation10], %s287
        %s289 = smul.u32 2, %s28
        %p290 = scmp.lt.s32.totalorder %s28, 0
        %s291 = ssub.s32 0, %s28
        %s292 = scalar_select %p290, %s291, %s28
        %s293 = sand.u32 %s292, 1
        %s294 = ssub.s32 0, %s293
        %s295 = scalar_select %p290, %s294, %s293
        %p296 = scmp.ne.s32.totalorder %s295, 0
        %p297 = scmp.lt.s32.totalorder %s295, 0
        %p298 = pnand %p297, %p296
        %p299 = pneg %p298
        %s300 = sadd.s32 %s295, 2
        %s301 = scalar_select %p299, %s300, %s295
        %p302 = scmp.eq.s32.totalorder %s28, 0
        // Predicated region
        $region57: #{tpu_custom_call.1} parent=43 // pred_check
          %p303 = pneg %p302
        $region58: #{tpu_custom_call.1} parent=43 // pred_check_branch
          %305 = sbr.rel (%p303) target = $region60
        $region59: #{tpu_custom_call.1} parent=43 // pred_region
          %s306 = smul.u32 %s27, 16
          %s307 = smul.addr %s306, 16
          %s308 = scalar_lea.hbm %s0, %s307
          %s309 = scalar_lea.vmem [#allocation2], 2
          // Predicated region
          $region61: #{tpu_custom_call.1} parent=59 // pred_check
            _
          $region62: #{tpu_custom_call.1} parent=59 // pred_check_branch
            %311 = sbr.rel target = $region64
          $region63: #{tpu_custom_call.1} parent=59 // pred_region
            %312 = sst [smem:[#allocation13]] [#allocation12]
            %313 = sst [smem:[#allocation14]] [#allocation11]
          $region64: #{tpu_custom_call.1} parent=59 // pred_fallthru
            _
          %315 = shalt.err (0)
          %s317 = sshll.u32 %s309, 4
          %s318 = int_to_ptr.vmem [resolvable:$true] %s317
          %320 = dma.hbm_to_vmem [thread:$0]  %s308, 256, %s318, [#allocation3]
        $region60: #{tpu_custom_call.1} parent=43 // pred_fallthru
          _
        %s321 = sadd.s32 %s28, 1
        %p322 = scmp.lt.s32.totalorder %s321, 1
        // Predicated region
        $region65: #{tpu_custom_call.1} parent=43 // pred_check
          %p323 = pneg %p322
        $region66: #{tpu_custom_call.1} parent=43 // pred_check_branch
          %325 = sbr.rel (%p323) target = $region68
        $region67: #{tpu_custom_call.1} parent=43 // pred_region
          %p326 = scmp.lt.s32.totalorder %s321, 0
          %s327 = ssub.s32 0, %s321
          %s328 = scalar_select %p326, %s327, %s321
          %s329 = sand.u32 %s328, 1
          %s330 = ssub.s32 0, %s329
          %s331 = scalar_select %p326, %s330, %s329
          %p332 = scmp.ne.s32.totalorder %s331, 0
          %p333 = scmp.lt.s32.totalorder %s331, 0
          %p334 = pnand %p333, %p332
          %p335 = pneg %p334
          %s336 = sadd.s32 %s331, 2
          %s337 = scalar_select %p335, %s336, %s331
          %s338 = smul.u32 %s27, 16
          %s339 = smul.addr %s338, 16
          %s340 = scalar_lea.hbm %s0, %s339
          %s341 = smul.u32 %s337, 24
          %s342 = sadd.s32 2, %s341
          %s343 = scalar_lea.vmem [#allocation2], %s342
          %s344 = scalar_lea.sflag [#allocation3], %s337
          // Predicated region
          $region69: #{tpu_custom_call.1} parent=67 // pred_check
            _
          $region70: #{tpu_custom_call.1} parent=67 // pred_check_branch
            %346 = sbr.rel target = $region72
          $region71: #{tpu_custom_call.1} parent=67 // pred_region
            %347 = sst [smem:[#allocation13]] [#allocation16]
            %348 = sst [smem:[#allocation14]] [#allocation15]
          $region72: #{tpu_custom_call.1} parent=67 // pred_fallthru
            _
          %350 = shalt.err (0)
          %s352 = sshll.u32 %s343, 4
          %s353 = int_to_ptr.vmem [resolvable:$true] %s352
          %355 = dma.hbm_to_vmem [thread:$0]  %s340, 256, %s353, %s344
        $region68: #{tpu_custom_call.1} parent=43 // pred_fallthru
          _
        %s356 = scalar_lea.sflag [#allocation3], %s301
        %s357 = smul.u32 16, 1
        %s358 = sshll.u32 %s357, 4
        %359 = dma.done %s356, %s358
        %s360 = smul.u32 %s28, 16
        %s361 = ssub.s32 %s360, 2
        %s362 = smul.u32 %s301, 24
        %s363 = scalar_lea.vmem [#allocation2], %s362
        %v364 = vld [vmem:[%s363] sm:$0xff]
        %v365 = vld [vmem:[%s363 + $0x8] sm:$0xff]
        %v366 = vld [vmem:[%s363 + $0x10] sm:$0xf]
        %v367 = vlaneseq
        %v368 = vshrl.u32 %v367, 7
        %v369 = vadd.s32 %v368, 8
        %v370 = vadd.s32 %v368, 16
        %v371 = vstv %s361
        %v372 = vadd.s32 %v368, %v371
        %v373 = vadd.s32 %v369, %v371
        %v374 = vadd.s32 %v370, %v371
        %vm375 = vcmp.ge.s32.totalorder %v372, 0
        %vm376 = vcmp.ge.s32.totalorder %v373, 0
        %vm377 = vcmp.ge.s32.totalorder %v374, 0
        %vm378 = vcmp.lt.s32.totalorder %v372, 16
        %vm379 = vcmp.lt.s32.totalorder %v373, 16
        %vm380 = vcmp.lt.s32.totalorder %v374, 16
        %vm381 = vmand %vm375, %vm378
        %vm382 = vmand %vm376, %vm379
        %vm383 = vmand %vm377, %vm380
        %v384 = vmul.f32 %v364, 0.5
        %v385 = vmul.f32 %v365, 0.5
        %v386 = vmul.f32 %v366, 0.5
        %v387 = vmul.f32 %v364, 0.70710677
        %v388 = vmul.f32 %v365, 0.70710677
        %v389 = vmul.f32 %v366, 0.70710677
        %v390 = vand.u32 2147483647, %v387
        %v391 = vand.u32 2147483647, %v388
        %v392 = vand.u32 2147483647, %v389
        %v393 = vmul.f32 %v390, 0.3275911
        %v394 = vmul.f32 %v391, 0.3275911
        %v395 = vmul.f32 %v392, 0.3275911
        %v396 = vadd.f32 %v393, 1.0
        %v397 = vadd.f32 %v394, 1.0
        %v398 = vadd.f32 %v395, 1.0
        %v399 = vrcp.pop %v396
        %v400 = vmul.f32 1.0, %v399
        %v401 = vrcp.pop %v397
        %v402 = vmul.f32 1.0, %v401
        %v403 = vrcp.pop %v398
        %v404 = vmul.f32 1.0, %v403
        %v405 = vmul.f32 %v400, 1.0614054
        %v406 = vmul.f32 %v402, 1.0614054
        %v407 = vmul.f32 %v404, 1.0614054
        %v408 = vadd.f32 %v405, -1.4531521
        %v409 = vadd.f32 %v406, -1.4531521
        %v410 = vadd.f32 %v407, -1.4531521
        %v411 = vmul.f32 %v400, %v408
        %v412 = vmul.f32 %v402, %v409
        %v413 = vmul.f32 %v404, %v410
        %v414 = vadd.f32 %v411, 1.4214138
        %v415 = vadd.f32 %v412, 1.4214138
        %v416 = vadd.f32 %v413, 1.4214138
        %v417 = vmul.f32 %v400, %v414
        %v418 = vmul.f32 %v402, %v415
        %v419 = vmul.f32 %v404, %v416
        %v420 = vadd.f32 %v417, -0.28449672
        %v421 = vadd.f32 %v418, -0.28449672
        %v422 = vadd.f32 %v419, -0.28449672
        %v423 = vmul.f32 %v400, %v420
        %v424 = vmul.f32 %v402, %v421
        %v425 = vmul.f32 %v404, %v422
        %v426 = vadd.f32 %v423, 0.2548296
        %v427 = vadd.f32 %v424, 0.2548296
        %v428 = vadd.f32 %v425, 0.2548296
        %v429 = vmul.f32 %v400, %v426
        %v430 = vmul.f32 %v402, %v427
        %v431 = vmul.f32 %v404, %v428
        %v432 = vsub.f32 0.0, %v390
        %v433 = vsub.f32 0.0, %v391
        %v434 = vsub.f32 0.0, %v392
        %v435 = vmul.f32 %v432, %v390
        %v436 = vmul.f32 %v433, %v391
        %v437 = vmul.f32 %v434, %v392
        %v438 = vmul.f32 %v435, 1.442695
        %v439 = vpow.pop %v438
        %v440 = vmul.f32 %v436, 1.442695
        %v441 = vpow.pop %v440
        %v442 = vmul.f32 %v437, 1.442695
        %v443 = vpow.pop %v442
        %v444 = vmul.f32 %v429, %v439
        %v445 = vmul.f32 %v430, %v441
        %v446 = vmul.f32 %v431, %v443
        %v447 = vsub.f32 1.0, %v444
        %v448 = vsub.f32 1.0, %v445
        %v449 = vsub.f32 1.0, %v446
        %vm450 = vcmp.lt.f32.partialorder %v387, 0.0
        %vm451 = vcmp.lt.f32.partialorder %v388, 0.0
        %vm452 = vcmp.lt.f32.partialorder %v389, 0.0
        %v453 = vsub.f32 0.0, %v447
        %v454 = vsub.f32 0.0, %v448
        %v455 = vsub.f32 0.0, %v449
        %v456 = vsel %vm450, %v453, %v447
        %v457 = vsel %vm451, %v454, %v448
        %v458 = vsel %vm452, %v455, %v449
        %v459 = vadd.f32 %v456, 1.0
        %v460 = vadd.f32 %v457, 1.0
        %v461 = vadd.f32 %v458, 1.0
        %v462 = vmul.f32 %v384, %v459
        %v463 = vmul.f32 %v385, %v460
        %v464 = vmul.f32 %v386, %v461
        %v465 = vsel %vm381, 1, 0
        %v466 = vsel %vm382, 1, 0
        %v467 = vsel %vm383, 1, 0
        %vm468 = vcmp.eq.s32.totalorder %v465, 1
        %vm469 = vcmp.eq.s32.totalorder %v466, 1
        %vm470 = vcmp.eq.s32.totalorder %v467, 1
        %v471 = vsel %vm468, %v462, 0.0
        %v472 = vsel %vm469, %v463, 0.0
        %v473 = vsel %vm470, %v464, 0.0
        %vm477 = vcmask 1046528
        %v478 = vrot.slane %v471, 1
        %v479 = vrot.slane %v472, 1
        %v480 = vsel %vm477, %v478, %v479
        %v481 = vrot.slane %v473, 1
        %v482 = vsel %vm477, %v479, %v481
        %vm486 = vcmask 1045504
        %v487 = vrot.slane %v471, 2
        %v488 = vrot.slane %v472, 2
        %v489 = vsel %vm486, %v487, %v488
        %v490 = vrot.slane %v473, 2
        %v491 = vsel %vm486, %v488, %v490
        %v495 = vld [vmem:[#allocation4] sm:$0xff]
        %v496 = vld [vmem:[#allocation4 + $0x8] sm:$0xff]
        %v497 = vld [vmem:[#allocation4 + $0x10] sm:$0xff]
        %v498 = vld [vmem:[#allocation4 + $0x18] sm:$0xff]
        %v499 = vld [vmem:[#allocation4 + $0x20] sm:$0xff]
        %v500 = vld [vmem:[#allocation4 + $0x28] sm:$0xff]
        %v501 = vld [vmem:[#allocation4 + $0x30] sm:$0xff]
        %v502 = vld [vmem:[#allocation4 + $0x38] sm:$0xff]
        %v503 = vld [vmem:[#allocation4 + $0x40] sm:$0xff]
        %v504 = vld [vmem:[#allocation4 + $0x48] sm:$0xff]
        %v505 = vld [vmem:[#allocation4 + $0x50] sm:$0xff]
        %v506 = vld [vmem:[#allocation4 + $0x58] sm:$0xff]
        %v507 = vld [vmem:[#allocation4 + $0x60] sm:$0xff]
        %v508 = vld [vmem:[#allocation4 + $0x68] sm:$0xff]
        %v509 = vld [vmem:[#allocation4 + $0x70] sm:$0xff]
        %v510 = vld [vmem:[#allocation4 + $0x78] sm:$0xff]
        %v511 = vld [vmem:[#allocation4 + $0x80] sm:$0xff]
        %v512 = vld [vmem:[#allocation4 + $0x88] sm:$0xff]
        %v513 = vld [vmem:[#allocation4 + $0x90] sm:$0xff]
        %v514 = vld [vmem:[#allocation4 + $0x98] sm:$0xff]
        %v515 = vld [vmem:[#allocation4 + $0xa0] sm:$0xff]
        %v516 = vld [vmem:[#allocation4 + $0xa8] sm:$0xff]
        %v517 = vld [vmem:[#allocation4 + $0xb0] sm:$0xff]
        %v518 = vld [vmem:[#allocation4 + $0xb8] sm:$0xff]
        %v519 = vld [vmem:[#allocation4 + $0xc0] sm:$0xff]
        %v520 = vld [vmem:[#allocation4 + $0xc8] sm:$0xff]
        %v521 = vld [vmem:[#allocation4 + $0xd0] sm:$0xff]
        %v522 = vld [vmem:[#allocation4 + $0xd8] sm:$0xff]
        %v523 = vld [vmem:[#allocation4 + $0xe0] sm:$0xff]
        %v524 = vld [vmem:[#allocation4 + $0xe8] sm:$0xff]
        %v525 = vld [vmem:[#allocation4 + $0xf0] sm:$0xff]
        %v526 = vld [vmem:[#allocation4 + $0xf8] sm:$0xff]
        %v527 = vld [vmem:[#allocation4 + $0x100] sm:$0xff]
        %v528 = vld [vmem:[#allocation4 + $0x108] sm:$0xff]
        %v529 = vld [vmem:[#allocation4 + $0x110] sm:$0xff]
        %v530 = vld [vmem:[#allocation4 + $0x118] sm:$0xff]
        %v531 = vld [vmem:[#allocation4 + $0x120] sm:$0xff]
        %v532 = vld [vmem:[#allocation4 + $0x128] sm:$0xff]
        %v533 = vld [vmem:[#allocation4 + $0x130] sm:$0xff]
        %v534 = vld [vmem:[#allocation4 + $0x138] sm:$0xff]
        %v535 = vld [vmem:[#allocation4 + $0x140] sm:$0xff]
        %v536 = vld [vmem:[#allocation4 + $0x148] sm:$0xff]
        %v537 = vld [vmem:[#allocation4 + $0x150] sm:$0xff]
        %v538 = vld [vmem:[#allocation4 + $0x158] sm:$0xff]
        %v539 = vld [vmem:[#allocation4 + $0x160] sm:$0xff]
        %v540 = vld [vmem:[#allocation4 + $0x168] sm:$0xff]
        %v541 = vld [vmem:[#allocation4 + $0x170] sm:$0xff]
        %v542 = vld [vmem:[#allocation4 + $0x178] sm:$0xff]
        %v543 = vld [vmem:[%s2] sm:$0x1]
        %v545 = vlaneseq
        %v546 = vshrl.u32 %v545, 7
        %v547 = vsub.s32 0, %v546
        %v548 = vrot.slane %v543, %v547
        %550 = vmatprep.subr.mxu0 0.0
        %551 = vmatpush1.msra.mxu0 %v495
        %552 = vmatprep.subr.mxu0 0.0
        %553 = vmatpush1.msra.mxu0 %v496
        %554 = vmatprep.subr.mxu0 0.0
        %555 = vmatpush1.msra.mxu0 %v497
        %556 = vmatprep.subr.mxu0 0.0
        %557 = vmatpush1.msra.mxu0 %v498
        %558 = vmatprep.subr.mxu0 0.0
        %559 = vmatpush1.msra.mxu0 %v499
        %560 = vmatprep.subr.mxu0 0.0
        %561 = vmatpush1.msra.mxu0 %v500
        %562 = vmatprep.subr.mxu0 0.0
        %563 = vmatpush1.msra.mxu0 %v501
        %564 = vmatprep.subr.mxu0 0.0
        %565 = vmatpush1.msra.mxu0 %v502
        %566 = vmatprep.subr.mxu0 0.0
        %567 = vmatpush1.msra.mxu0 %v503
        %568 = vmatprep.subr.mxu0 0.0
        %569 = vmatpush1.msra.mxu0 %v504
        %570 = vmatprep.subr.mxu0 0.0
        %571 = vmatpush1.msra.mxu0 %v505
        %572 = vmatprep.subr.mxu0 0.0
        %573 = vmatpush1.msra.mxu0 %v506
        %574 = vmatprep.subr.mxu0 0.0
        %575 = vmatpush1.msra.mxu0 %v507
        %576 = vmatprep.subr.mxu0 0.0
        %577 = vmatpush1.msra.mxu0 %v508
        %578 = vmatprep.subr.mxu0 0.0
        %579 = vmatpush1.msra.mxu0 %v509
        %580 = vmatprep.subr.mxu0 0.0
        %581 = vmatpush1.msra.mxu0 %v510
        %582 = vmatprep.subr.mxu0 0.0
        %583 = vmatpush1.msra.mxu0 %v511
        %584 = vmatprep.subr.mxu0 0.0
        %585 = vmatpush1.msra.mxu0 %v512
        %586 = vmatprep.subr.mxu0 0.0
        %587 = vmatpush1.msra.mxu0 %v513
        %588 = vmatprep.subr.mxu0 0.0
        %589 = vmatpush1.msra.mxu0 %v514
        %590 = vmatprep.subr.mxu0 0.0
        %591 = vmatpush1.msra.mxu0 %v515
        %592 = vmatprep.subr.mxu0 0.0
        %593 = vmatpush1.msra.mxu0 %v516
        %594 = vmatprep.subr.mxu0 0.0
        %595 = vmatpush1.msra.mxu0 %v517
        %596 = vmatprep.subr.mxu0 0.0
        %597 = vmatpush1.msra.mxu0 %v518
        %598 = vmatprep.subr.mxu0 0.0
        %599 = vmatpush1.msra.mxu0 %v519
        %600 = vmatprep.subr.mxu0 0.0
        %601 = vmatpush1.msra.mxu0 %v520
        %602 = vmatprep.subr.mxu0 0.0
        %603 = vmatpush1.msra.mxu0 %v521
        %604 = vmatprep.subr.mxu0 0.0
        %605 = vmatpush1.msra.mxu0 %v522
        %606 = vmatprep.subr.mxu0 0.0
        %607 = vmatpush1.msra.mxu0 %v523
        %608 = vmatprep.subr.mxu0 0.0
        %609 = vmatpush1.msra.mxu0 %v524
        %610 = vmatprep.subr.mxu0 0.0
        %611 = vmatpush1.msra.mxu0 %v525
        %612 = vmatprep.subr.mxu0 0.0
        %613 = vmatpush1.msra.mxu0 %v526
        %614 = vmatprep.mubr.f32.mxu0 %v480
        %615 = vmatmul.mubr.f32.gmra.mrb[0].mxu0 %v471
        %v616 = vpop.f32.mrb[0].mxu0
        %v617 = vadd.f32 %v548, %v616
        %v618 = vpop.f32.mrb[0].mxu0
        %619 = vmatprep.mubr.f32.mxu0 %v482
        %620 = vmatmul.mubr.f32.gmra.mrb[0].mxu0 %v472
        %v621 = vpop.f32.mrb[0].mxu0
        %v622 = vadd.f32 %v548, %v621
        %v623 = vpop.f32.mrb[0].mxu0
        %624 = vmatprep.mubr.f32.mxu0 %v481
        %625 = vmatmul.mubr.f32.gmra.mrb[0].mxu0 %v473
        %v626 = vpop.f32.mrb[0].mxu0
        %v627 = vadd.f32 %v548, %v626
        %v628 = vpop.f32.mrb[0].mxu0
        %629 = vdwg.mxu0
        %630 = vmatprep.subr.mxu0 0.0
        %631 = vmatpush1.msra.mxu0 %v527
        %632 = vmatprep.subr.mxu0 0.0
        %633 = vmatpush1.msra.mxu0 %v528
        %634 = vmatprep.subr.mxu0 0.0
        %635 = vmatpush1.msra.mxu0 %v529
        %636 = vmatprep.subr.mxu0 0.0
        %637 = vmatpush1.msra.mxu0 %v530
        %638 = vmatprep.subr.mxu0 0.0
        %639 = vmatpush1.msra.mxu0 %v531
        %640 = vmatprep.subr.mxu0 0.0
        %641 = vmatpush1.msra.mxu0 %v532
        %642 = vmatprep.subr.mxu0 0.0
        %643 = vmatpush1.msra.mxu0 %v533
        %644 = vmatprep.subr.mxu0 0.0
        %645 = vmatpush1.msra.mxu0 %v534
        %646 = vmatprep.subr.mxu0 0.0
        %647 = vmatpush1.msra.mxu0 %v535
        %648 = vmatprep.subr.mxu0 0.0
        %649 = vmatpush1.msra.mxu0 %v536
        %650 = vmatprep.subr.mxu0 0.0
        %651 = vmatpush1.msra.mxu0 %v537
        %652 = vmatprep.subr.mxu0 0.0
        %653 = vmatpush1.msra.mxu0 %v538
        %654 = vmatprep.subr.mxu0 0.0
        %655 = vmatpush1.msra.mxu0 %v539
        %656 = vmatprep.subr.mxu0 0.0
        %657 = vmatpush1.msra.mxu0 %v540
        %658 = vmatprep.subr.mxu0 0.0
        %659 = vmatpush1.msra.mxu0 %v541
        %660 = vmatprep.subr.mxu0 0.0
        %661 = vmatpush1.msra.mxu0 %v542
        %662 = vmatprep.subr.mxu0 0.0
        %663 = vmatpush1.msra.mxu0 0.0
        %664 = vmatprep.subr.mxu0 0.0
        %665 = vmatpush1.msra.mxu0 0.0
        %666 = vmatprep.subr.mxu0 0.0
        %667 = vmatpush1.msra.mxu0 0.0
        %668 = vmatprep.subr.mxu0 0.0
        %669 = vmatpush1.msra.mxu0 0.0
        %670 = vmatprep.subr.mxu0 0.0
        %671 = vmatpush1.msra.mxu0 0.0
        %672 = vmatprep.subr.mxu0 0.0
        %673 = vmatpush1.msra.mxu0 0.0
        %674 = vmatprep.subr.mxu0 0.0
        %675 = vmatpush1.msra.mxu0 0.0
        %676 = vmatprep.subr.mxu0 0.0
        %677 = vmatpush1.msra.mxu0 0.0
        %678 = vmatprep.subr.mxu0 0.0
        %679 = vmatpush1.msra.mxu0 0.0
        %680 = vmatprep.subr.mxu0 0.0
        %681 = vmatpush1.msra.mxu0 0.0
        %682 = vmatprep.subr.mxu0 0.0
        %683 = vmatpush1.msra.mxu0 0.0
        %684 = vmatprep.subr.mxu0 0.0
        %685 = vmatpush1.msra.mxu0 0.0
        %686 = vmatprep.subr.mxu0 0.0
        %687 = vmatpush1.msra.mxu0 0.0
        %688 = vmatprep.subr.mxu0 0.0
        %689 = vmatpush1.msra.mxu0 0.0
        %690 = vmatprep.subr.mxu0 0.0
        %691 = vmatpush1.msra.mxu0 0.0
        %692 = vmatprep.subr.mxu0 0.0
        %693 = vmatpush1.msra.mxu0 0.0
        %694 = vmatprep.mubr.f32.mxu0 0.0
        %695 = vmatmul.mubr.f32.gmra.mrb[0].mxu0 %v489
        %v696 = vpop.f32.mrb[0].mxu0
        %v697 = vadd.f32 %v617, %v696
        %v698 = vpop.f32.mrb[0].mxu0
        %699 = vmatprep.mubr.f32.mxu0 0.0
        %700 = vmatmul.mubr.f32.gmra.mrb[0].mxu0 %v491
        %v701 = vpop.f32.mrb[0].mxu0
        %v702 = vadd.f32 %v622, %v701
        %v703 = vpop.f32.mrb[0].mxu0
        %704 = vmatprep.mubr.f32.mxu0 0.0
        %705 = vmatmul.mubr.f32.gmra.mrb[0].mxu0 %v490
        %v706 = vpop.f32.mrb[0].mxu0
        %v707 = vadd.f32 %v627, %v706
        %v708 = vpop.f32.mrb[0].mxu0
        %709 = vdwg.mxu0
        %s710 = ssub.s32 %s360, 1
        %v711 = vstv %s710
        %v712 = vadd.s32 %v368, %v711
        %v713 = vadd.s32 %v369, %v711
        %v714 = vadd.s32 %v370, %v711
        %vm715 = vcmp.ge.s32.totalorder %v712, 0
        %vm716 = vcmp.ge.s32.totalorder %v713, 0
        %vm717 = vcmp.ge.s32.totalorder %v714, 0
        %vm718 = vcmp.lt.s32.totalorder %v712, 16
        %vm719 = vcmp.lt.s32.totalorder %v713, 16
        %vm720 = vcmp.lt.s32.totalorder %v714, 16
        %vm721 = vmand %vm715, %vm718
        %vm722 = vmand %vm716, %vm719
        %vm723 = vmand %vm717, %vm720
        %v724 = vmul.f32 %v697, 0.5
        %v725 = vmul.f32 %v702, 0.5
        %v726 = vmul.f32 %v707, 0.5
        %v727 = vmul.f32 %v697, 0.70710677
        %v728 = vmul.f32 %v702, 0.70710677
        %v729 = vmul.f32 %v707, 0.70710677
        %v730 = vand.u32 2147483647, %v727
        %v731 = vand.u32 2147483647, %v728
        %v732 = vand.u32 2147483647, %v729
        %v733 = vmul.f32 %v730, 0.3275911
        %v734 = vmul.f32 %v731, 0.3275911
        %v735 = vmul.f32 %v732, 0.3275911
        %v736 = vadd.f32 %v733, 1.0
        %v737 = vadd.f32 %v734, 1.0
        %v738 = vadd.f32 %v735, 1.0
        %v739 = vrcp.pop %v736
        %v740 = vmul.f32 1.0, %v739
        %v741 = vrcp.pop %v737
        %v742 = vmul.f32 1.0, %v741
        %v743 = vrcp.pop %v738
        %v744 = vmul.f32 1.0, %v743
        %v745 = vmul.f32 %v740, 1.0614054
        %v746 = vmul.f32 %v742, 1.0614054
        %v747 = vmul.f32 %v744, 1.0614054
        %v748 = vadd.f32 %v745, -1.4531521
        %v749 = vadd.f32 %v746, -1.4531521
        %v750 = vadd.f32 %v747, -1.4531521
        %v751 = vmul.f32 %v740, %v748
        %v752 = vmul.f32 %v742, %v749
        %v753 = vmul.f32 %v744, %v750
        %v754 = vadd.f32 %v751, 1.4214138
        %v755 = vadd.f32 %v752, 1.4214138
        %v756 = vadd.f32 %v753, 1.4214138
        %v757 = vmul.f32 %v740, %v754
        %v758 = vmul.f32 %v742, %v755
        %v759 = vmul.f32 %v744, %v756
        %v760 = vadd.f32 %v757, -0.28449672
        %v761 = vadd.f32 %v758, -0.28449672
        %v762 = vadd.f32 %v759, -0.28449672
        %v763 = vmul.f32 %v740, %v760
        %v764 = vmul.f32 %v742, %v761
        %v765 = vmul.f32 %v744, %v762
        %v766 = vadd.f32 %v763, 0.2548296
        %v767 = vadd.f32 %v764, 0.2548296
        %v768 = vadd.f32 %v765, 0.2548296
        %v769 = vmul.f32 %v740, %v766
        %v770 = vmul.f32 %v742, %v767
        %v771 = vmul.f32 %v744, %v768
        %v772 = vsub.f32 0.0, %v730
        %v773 = vsub.f32 0.0, %v731
        %v774 = vsub.f32 0.0, %v732
        %v775 = vmul.f32 %v772, %v730
        %v776 = vmul.f32 %v773, %v731
        %v777 = vmul.f32 %v774, %v732
        %v778 = vmul.f32 %v775, 1.442695
        %v779 = vpow.pop %v778
        %v780 = vmul.f32 %v776, 1.442695
        %v781 = vpow.pop %v780
        %v782 = vmul.f32 %v777, 1.442695
        %v783 = vpow.pop %v782
        %v784 = vmul.f32 %v769, %v779
        %v785 = vmul.f32 %v770, %v781
        %v786 = vmul.f32 %v771, %v783
        %v787 = vsub.f32 1.0, %v784
        %v788 = vsub.f32 1.0, %v785
        %v789 = vsub.f32 1.0, %v786
        %vm790 = vcmp.lt.f32.partialorder %v727, 0.0
        %vm791 = vcmp.lt.f32.partialorder %v728, 0.0
        %vm792 = vcmp.lt.f32.partialorder %v729, 0.0
        %v793 = vsub.f32 0.0, %v787
        %v794 = vsub.f32 0.0, %v788
        %v795 = vsub.f32 0.0, %v789
        %v796 = vsel %vm790, %v793, %v787
        %v797 = vsel %vm791, %v794, %v788
        %v798 = vsel %vm792, %v795, %v789
        %v799 = vadd.f32 %v796, 1.0
        %v800 = vadd.f32 %v797, 1.0
        %v801 = vadd.f32 %v798, 1.0
        %v802 = vmul.f32 %v724, %v799
        %v803 = vmul.f32 %v725, %v800
        %v804 = vmul.f32 %v726, %v801
        %v805 = vsel %vm721, 1, 0
        %v806 = vsel %vm722, 1, 0
        %v807 = vsel %vm723, 1, 0
        %vm808 = vcmp.eq.s32.totalorder %v805, 1
        %vm809 = vcmp.eq.s32.totalorder %v806, 1
        %vm810 = vcmp.eq.s32.totalorder %v807, 1
        %v811 = vsel %vm808, %v802, 0.0
        %v812 = vsel %vm809, %v803, 0.0
        %v813 = vsel %vm810, %v804, 0.0
        %v817 = vrot.slane %v811, 1
        %v818 = vrot.slane %v812, 1
        %v819 = vsel %vm477, %v817, %v818
        %v820 = vrot.slane %v813, 1
        %v821 = vsel %vm477, %v818, %v820
        %v824 = vrot.slane %v811, 2
        %v825 = vrot.slane %v812, 2
        %v826 = vsel %vm486, %v824, %v825
        %v827 = vrot.slane %v813, 2
        %v828 = vsel %vm486, %v825, %v827
        %v831 = vld [vmem:[#allocation7] sm:$0xff]
        %v832 = vld [vmem:[#allocation7 + $0x8] sm:$0xff]
        %v833 = vld [vmem:[#allocation7 + $0x10] sm:$0xff]
        %v834 = vld [vmem:[#allocation7 + $0x18] sm:$0xff]
        %v835 = vld [vmem:[#allocation7 + $0x20] sm:$0xff]
        %v836 = vld [vmem:[#allocation7 + $0x28] sm:$0xff]
        %v837 = vld [vmem:[#allocation7 + $0x30] sm:$0xff]
        %v838 = vld [vmem:[#allocation7 + $0x38] sm:$0xff]
        %v839 = vld [vmem:[#allocation7 + $0x40] sm:$0xff]
        %v840 = vld [vmem:[#allocation7 + $0x48] sm:$0xff]
        %v841 = vld [vmem:[#allocation7 + $0x50] sm:$0xff]
        %v842 = vld [vmem:[#allocation7 + $0x58] sm:$0xff]
        %v843 = vld [vmem:[#allocation7 + $0x60] sm:$0xff]
        %v844 = vld [vmem:[#allocation7 + $0x68] sm:$0xff]
        %v845 = vld [vmem:[#allocation7 + $0x70] sm:$0xff]
        %v846 = vld [vmem:[#allocation7 + $0x78] sm:$0xff]
        %v847 = vld [vmem:[#allocation7 + $0x80] sm:$0xff]
        %v848 = vld [vmem:[#allocation7 + $0x88] sm:$0xff]
        %v849 = vld [vmem:[#allocation7 + $0x90] sm:$0xff]
        %v850 = vld [vmem:[#allocation7 + $0x98] sm:$0xff]
        %v851 = vld [vmem:[#allocation7 + $0xa0] sm:$0xff]
        %v852 = vld [vmem:[#allocation7 + $0xa8] sm:$0xff]
        %v853 = vld [vmem:[#allocation7 + $0xb0] sm:$0xff]
        %v854 = vld [vmem:[#allocation7 + $0xb8] sm:$0xff]
        %v855 = vld [vmem:[#allocation7 + $0xc0] sm:$0xff]
        %v856 = vld [vmem:[#allocation7 + $0xc8] sm:$0xff]
        %v857 = vld [vmem:[#allocation7 + $0xd0] sm:$0xff]
        %v858 = vld [vmem:[#allocation7 + $0xd8] sm:$0xff]
        %v859 = vld [vmem:[#allocation7 + $0xe0] sm:$0xff]
        %v860 = vld [vmem:[#allocation7 + $0xe8] sm:$0xff]
        %v861 = vld [vmem:[#allocation7 + $0xf0] sm:$0xff]
        %v862 = vld [vmem:[#allocation7 + $0xf8] sm:$0xff]
        %v863 = vld [vmem:[#allocation7 + $0x100] sm:$0xff]
        %v864 = vld [vmem:[#allocation7 + $0x108] sm:$0xff]
        %v865 = vld [vmem:[#allocation7 + $0x110] sm:$0xff]
        %v866 = vld [vmem:[#allocation7 + $0x118] sm:$0xff]
        %v867 = vld [vmem:[#allocation7 + $0x120] sm:$0xff]
        %v868 = vld [vmem:[#allocation7 + $0x128] sm:$0xff]
        %v869 = vld [vmem:[#allocation7 + $0x130] sm:$0xff]
        %v870 = vld [vmem:[#allocation7 + $0x138] sm:$0xff]
        %v871 = vld [vmem:[#allocation7 + $0x140] sm:$0xff]
        %v872 = vld [vmem:[#allocation7 + $0x148] sm:$0xff]
        %v873 = vld [vmem:[#allocation7 + $0x150] sm:$0xff]
        %v874 = vld [vmem:[#allocation7 + $0x158] sm:$0xff]
        %v875 = vld [vmem:[#allocation7 + $0x160] sm:$0xff]
        %v876 = vld [vmem:[#allocation7 + $0x168] sm:$0xff]
        %v877 = vld [vmem:[#allocation7 + $0x170] sm:$0xff]
        %v878 = vld [vmem:[#allocation7 + $0x178] sm:$0xff]
        %v879 = vld [vmem:[%s4] sm:$0x1]
        %v881 = vlaneseq
        %v882 = vshrl.u32 %v881, 7
        %v883 = vsub.s32 0, %v882
        %v884 = vrot.slane %v879, %v883
        %886 = vmatprep.subr.mxu0 0.0
        %887 = vmatpush1.msra.mxu0 %v831
        %888 = vmatprep.subr.mxu0 0.0
        %889 = vmatpush1.msra.mxu0 %v832
        %890 = vmatprep.subr.mxu0 0.0
        %891 = vmatpush1.msra.mxu0 %v833
        %892 = vmatprep.subr.mxu0 0.0
        %893 = vmatpush1.msra.mxu0 %v834
        %894 = vmatprep.subr.mxu0 0.0
        %895 = vmatpush1.msra.mxu0 %v835
        %896 = vmatprep.subr.mxu0 0.0
        %897 = vmatpush1.msra.mxu0 %v836
        %898 = vmatprep.subr.mxu0 0.0
        %899 = vmatpush1.msra.mxu0 %v837
        %900 = vmatprep.subr.mxu0 0.0
        %901 = vmatpush1.msra.mxu0 %v838
        %902 = vmatprep.subr.mxu0 0.0
        %903 = vmatpush1.msra.mxu0 %v839
        %904 = vmatprep.subr.mxu0 0.0
        %905 = vmatpush1.msra.mxu0 %v840
        %906 = vmatprep.subr.mxu0 0.0
        %907 = vmatpush1.msra.mxu0 %v841
        %908 = vmatprep.subr.mxu0 0.0
        %909 = vmatpush1.msra.mxu0 %v842
        %910 = vmatprep.subr.mxu0 0.0
        %911 = vmatpush1.msra.mxu0 %v843
        %912 = vmatprep.subr.mxu0 0.0
        %913 = vmatpush1.msra.mxu0 %v844
        %914 = vmatprep.subr.mxu0 0.0
        %915 = vmatpush1.msra.mxu0 %v845
        %916 = vmatprep.subr.mxu0 0.0
        %917 = vmatpush1.msra.mxu0 %v846
        %918 = vmatprep.subr.mxu0 0.0
        %919 = vmatpush1.msra.mxu0 %v847
        %920 = vmatprep.subr.mxu0 0.0
        %921 = vmatpush1.msra.mxu0 %v848
        %922 = vmatprep.subr.mxu0 0.0
        %923 = vmatpush1.msra.mxu0 %v849
        %924 = vmatprep.subr.mxu0 0.0
        %925 = vmatpush1.msra.mxu0 %v850
        %926 = vmatprep.subr.mxu0 0.0
        %927 = vmatpush1.msra.mxu0 %v851
        %928 = vmatprep.subr.mxu0 0.0
        %929 = vmatpush1.msra.mxu0 %v852
        %930 = vmatprep.subr.mxu0 0.0
        %931 = vmatpush1.msra.mxu0 %v853
        %932 = vmatprep.subr.mxu0 0.0
        %933 = vmatpush1.msra.mxu0 %v854
        %934 = vmatprep.subr.mxu0 0.0
        %935 = vmatpush1.msra.mxu0 %v855
        %936 = vmatprep.subr.mxu0 0.0
        %937 = vmatpush1.msra.mxu0 %v856
        %938 = vmatprep.subr.mxu0 0.0
        %939 = vmatpush1.msra.mxu0 %v857
        %940 = vmatprep.subr.mxu0 0.0
        %941 = vmatpush1.msra.mxu0 %v858
        %942 = vmatprep.subr.mxu0 0.0
        %943 = vmatpush1.msra.mxu0 %v859
        %944 = vmatprep.subr.mxu0 0.0
        %945 = vmatpush1.msra.mxu0 %v860
        %946 = vmatprep.subr.mxu0 0.0
        %947 = vmatpush1.msra.mxu0 %v861
        %948 = vmatprep.subr.mxu0 0.0
        %949 = vmatpush1.msra.mxu0 %v862
        %950 = vmatprep.mubr.f32.mxu0 %v819
        %951 = vmatmul.mubr.f32.gmra.mrb[0].mxu0 %v811
        %v952 = vpop.f32.mrb[0].mxu0
        %v953 = vadd.f32 %v884, %v952
        %v954 = vpop.f32.mrb[0].mxu0
        %955 = vmatprep.mubr.f32.mxu0 %v821
        %956 = vmatmul.mubr.f32.gmra.mrb[0].mxu0 %v812
        %v957 = vpop.f32.mrb[0].mxu0
        %v958 = vadd.f32 %v884, %v957
        %v959 = vpop.f32.mrb[0].mxu0
        %960 = vdwg.mxu0
        %961 = vmatprep.subr.mxu0 0.0
        %962 = vmatpush1.msra.mxu0 %v863
        %963 = vmatprep.subr.mxu0 0.0
        %964 = vmatpush1.msra.mxu0 %v864
        %965 = vmatprep.subr.mxu0 0.0
        %966 = vmatpush1.msra.mxu0 %v865
        %967 = vmatprep.subr.mxu0 0.0
        %968 = vmatpush1.msra.mxu0 %v866
        %969 = vmatprep.subr.mxu0 0.0
        %970 = vmatpush1.msra.mxu0 %v867
        %971 = vmatprep.subr.mxu0 0.0
        %972 = vmatpush1.msra.mxu0 %v868
        %973 = vmatprep.subr.mxu0 0.0
        %974 = vmatpush1.msra.mxu0 %v869
        %975 = vmatprep.subr.mxu0 0.0
        %976 = vmatpush1.msra.mxu0 %v870
        %977 = vmatprep.subr.mxu0 0.0
        %978 = vmatpush1.msra.mxu0 %v871
        %979 = vmatprep.subr.mxu0 0.0
        %980 = vmatpush1.msra.mxu0 %v872
        %981 = vmatprep.subr.mxu0 0.0
        %982 = vmatpush1.msra.mxu0 %v873
        %983 = vmatprep.subr.mxu0 0.0
        %984 = vmatpush1.msra.mxu0 %v874
        %985 = vmatprep.subr.mxu0 0.0
        %986 = vmatpush1.msra.mxu0 %v875
        %987 = vmatprep.subr.mxu0 0.0
        %988 = vmatpush1.msra.mxu0 %v876
        %989 = vmatprep.subr.mxu0 0.0
        %990 = vmatpush1.msra.mxu0 %v877
        %991 = vmatprep.subr.mxu0 0.0
        %992 = vmatpush1.msra.mxu0 %v878
        %993 = vmatprep.subr.mxu0 0.0
        %994 = vmatpush1.msra.mxu0 0.0
        %995 = vmatprep.subr.mxu0 0.0
        %996 = vmatpush1.msra.mxu0 0.0
        %997 = vmatprep.subr.mxu0 0.0
        %998 = vmatpush1.msra.mxu0 0.0
        %999 = vmatprep.subr.mxu0 0.0
        %1000 = vmatpush1.msra.mxu0 0.0
        %1001 = vmatprep.subr.mxu0 0.0
        %1002 = vmatpush1.msra.mxu0 0.0
        %1003 = vmatprep.subr.mxu0 0.0
        %1004 = vmatpush1.msra.mxu0 0.0
        %1005 = vmatprep.subr.mxu0 0.0
        %1006 = vmatpush1.msra.mxu0 0.0
        %1007 = vmatprep.subr.mxu0 0.0
        %1008 = vmatpush1.msra.mxu0 0.0
        %1009 = vmatprep.subr.mxu0 0.0
        %1010 = vmatpush1.msra.mxu0 0.0
        %1011 = vmatprep.subr.mxu0 0.0
        %1012 = vmatpush1.msra.mxu0 0.0
        %1013 = vmatprep.subr.mxu0 0.0
        %1014 = vmatpush1.msra.mxu0 0.0
        %1015 = vmatprep.subr.mxu0 0.0
        %1016 = vmatpush1.msra.mxu0 0.0
        %1017 = vmatprep.subr.mxu0 0.0
        %1018 = vmatpush1.msra.mxu0 0.0
        %1019 = vmatprep.subr.mxu0 0.0
        %1020 = vmatpush1.msra.mxu0 0.0
        %1021 = vmatprep.subr.mxu0 0.0
        %1022 = vmatpush1.msra.mxu0 0.0
        %1023 = vmatprep.subr.mxu0 0.0
        %1024 = vmatpush1.msra.mxu0 0.0
        %1025 = vmatprep.mubr.f32.mxu0 0.0
        %1026 = vmatmul.mubr.f32.gmra.mrb[0].mxu0 %v826
        %v1027 = vpop.f32.mrb[0].mxu0
        %v1028 = vadd.f32 %v953, %v1027
        %v1029 = vpop.f32.mrb[0].mxu0
        %1030 = vmatprep.mubr.f32.mxu0 0.0
        %1031 = vmatmul.mubr.f32.gmra.mrb[0].mxu0 %v828
        %v1032 = vpop.f32.mrb[0].mxu0
        %v1033 = vadd.f32 %v958, %v1032
        %v1034 = vpop.f32.mrb[0].mxu0
        %1035 = vdwg.mxu0
        %v1036 = vsel %vm468, %v364, 0.0
        %v1037 = vsel %vm469, %v365, 0.0
        %v1038 = vsel %vm470, %v366, 0.0
        %v1039 = vld [vmem:[#allocation9] sm:$0xff]
        %v1040 = vld [vmem:[#allocation9 + $0x8] sm:$0xff]
        %v1041 = vld [vmem:[#allocation9 + $0x10] sm:$0xff]
        %v1042 = vld [vmem:[#allocation9 + $0x18] sm:$0xff]
        %v1043 = vld [vmem:[#allocation9 + $0x20] sm:$0xff]
        %v1044 = vld [vmem:[#allocation9 + $0x28] sm:$0xff]
        %v1045 = vld [vmem:[#allocation9 + $0x30] sm:$0xff]
        %v1046 = vld [vmem:[#allocation9 + $0x38] sm:$0xff]
        %v1047 = vld [vmem:[#allocation9 + $0x40] sm:$0xff]
        %v1048 = vld [vmem:[#allocation9 + $0x48] sm:$0xff]
        %v1049 = vld [vmem:[#allocation9 + $0x50] sm:$0xff]
        %v1050 = vld [vmem:[#allocation9 + $0x58] sm:$0xff]
        %v1051 = vld [vmem:[#allocation9 + $0x60] sm:$0xff]
        %v1052 = vld [vmem:[#allocation9 + $0x68] sm:$0xff]
        %v1053 = vld [vmem:[#allocation9 + $0x70] sm:$0xff]
        %v1054 = vld [vmem:[#allocation9 + $0x78] sm:$0xff]
        %v1055 = vld [vmem:[%s6] sm:$0x1]
        %v1057 = vlaneseq
        %v1058 = vshrl.u32 %v1057, 7
        %v1059 = vsub.s32 0, %v1058
        %v1060 = vrot.slane %v1055, %v1059
        %v1065 = vrot.slane %v1036, 2
        %v1066 = vrot.slane %v1037, 2
        %v1067 = vsel %vm486, %v1065, %v1066
        %v1068 = vrot.slane %v1038, 2
        %v1069 = vsel %vm486, %v1066, %v1068
        %1072 = vmatprep.subr.mxu0 0.0
        %1073 = vmatpush1.msra.mxu0 %v1039
        %1074 = vmatprep.subr.mxu0 0.0
        %1075 = vmatpush1.msra.mxu0 %v1040
        %1076 = vmatprep.subr.mxu0 0.0
        %1077 = vmatpush1.msra.mxu0 %v1041
        %1078 = vmatprep.subr.mxu0 0.0
        %1079 = vmatpush1.msra.mxu0 %v1042
        %1080 = vmatprep.subr.mxu0 0.0
        %1081 = vmatpush1.msra.mxu0 %v1043
        %1082 = vmatprep.subr.mxu0 0.0
        %1083 = vmatpush1.msra.mxu0 %v1044
        %1084 = vmatprep.subr.mxu0 0.0
        %1085 = vmatpush1.msra.mxu0 %v1045
        %1086 = vmatprep.subr.mxu0 0.0
        %1087 = vmatpush1.msra.mxu0 %v1046
        %1088 = vmatprep.subr.mxu0 0.0
        %1089 = vmatpush1.msra.mxu0 %v1047
        %1090 = vmatprep.subr.mxu0 0.0
        %1091 = vmatpush1.msra.mxu0 %v1048
        %1092 = vmatprep.subr.mxu0 0.0
        %1093 = vmatpush1.msra.mxu0 %v1049
        %1094 = vmatprep.subr.mxu0 0.0
        %1095 = vmatpush1.msra.mxu0 %v1050
        %1096 = vmatprep.subr.mxu0 0.0
        %1097 = vmatpush1.msra.mxu0 %v1051
        %1098 = vmatprep.subr.mxu0 0.0
        %1099 = vmatpush1.msra.mxu0 %v1052
        %1100 = vmatprep.subr.mxu0 0.0
        %1101 = vmatpush1.msra.mxu0 %v1053
        %1102 = vmatprep.subr.mxu0 0.0
        %1103 = vmatpush1.msra.mxu0 %v1054
        %1104 = vmatprep.subr.mxu0 0.0
        %1105 = vmatpush1.msra.mxu0 0.0
        %1106 = vmatprep.subr.mxu0 0.0
        %1107 = vmatpush1.msra.mxu0 0.0
        %1108 = vmatprep.subr.mxu0 0.0
        %1109 = vmatpush1.msra.mxu0 0.0
        %1110 = vmatprep.subr.mxu0 0.0
        %1111 = vmatpush1.msra.mxu0 0.0
        %1112 = vmatprep.subr.mxu0 0.0
        %1113 = vmatpush1.msra.mxu0 0.0
        %1114 = vmatprep.subr.mxu0 0.0
        %1115 = vmatpush1.msra.mxu0 0.0
        %1116 = vmatprep.subr.mxu0 0.0
        %1117 = vmatpush1.msra.mxu0 0.0
        %1118 = vmatprep.subr.mxu0 0.0
        %1119 = vmatpush1.msra.mxu0 0.0
        %1120 = vmatprep.subr.mxu0 0.0
        %1121 = vmatpush1.msra.mxu0 0.0
        %1122 = vmatprep.subr.mxu0 0.0
        %1123 = vmatpush1.msra.mxu0 0.0
        %1124 = vmatprep.subr.mxu0 0.0
        %1125 = vmatpush1.msra.mxu0 0.0
        %1126 = vmatprep.subr.mxu0 0.0
        %1127 = vmatpush1.msra.mxu0 0.0
        %1128 = vmatprep.subr.mxu0 0.0
        %1129 = vmatpush1.msra.mxu0 0.0
        %1130 = vmatprep.subr.mxu0 0.0
        %1131 = vmatpush1.msra.mxu0 0.0
        %1132 = vmatprep.subr.mxu0 0.0
        %1133 = vmatpush1.msra.mxu0 0.0
        %1134 = vmatprep.subr.mxu0 0.0
        %1135 = vmatpush1.msra.mxu0 0.0
        %1136 = vmatprep.mubr.f32.mxu0 0.0
        %1137 = vmatmul.mubr.f32.gmra.mrb[0].mxu0 %v1067
        %v1138 = vpop.f32.mrb[0].mxu0
        %v1139 = vadd.f32 %v1060, %v1138
        %v1140 = vpop.f32.mrb[0].mxu0
        %1141 = vmatprep.mubr.f32.mxu0 0.0
        %1142 = vmatmul.mubr.f32.gmra.mrb[0].mxu0 %v1069
        %v1143 = vpop.f32.mrb[0].mxu0
        %v1144 = vadd.f32 %v1060, %v1143
        %v1145 = vpop.f32.mrb[0].mxu0
        %1146 = vdwg.mxu0
        %v1147 = vadd.f32 %v1028, %v1139
        %v1148 = vadd.f32 %v1033, %v1144
        %vm1151 = vcmask 1041408
        %v1152 = vrot.slane %v1147, 6
        %v1153 = vrot.slane %v1148, 6
        %v1154 = vsel %vm1151, %v1152, %v1153
        %v1158 = vsel %vm468, %v1152, 0.0
        %v1159 = vsel %vm469, %v1154, 0.0
        %v1160 = vsel %vm470, %v1153, 0.0
        %1161 = vst [vmem:[%s288 - $0x2] sm:$0xfc] %v1158
        %1162 = vst [vmem:[%s288 + $0x6] sm:$0xff] %v1159
        %1163 = vst [vmem:[%s288 + $0xe] sm:$0x3] %v1160
        %s1164 = sand.u32 %s171, 1
        %s1165 = scalar_lea.sflag [#allocation6], %s1164
        %s1166 = sand.u32 %s171, 1
        %s1167 = smul.addr %s1166, 16
        %s1168 = scalar_lea.vmem [#allocation10], %s1167
        // Predicated region
        $region73: #{tpu_custom_call.1} parent=43 // pred_check
          %p1169 = pneg %p181
        $region74: #{tpu_custom_call.1} parent=43 // pred_check_branch
          %1171 = sbr.rel (%p1169) target = $region76
        $region75: #{tpu_custom_call.1} parent=43 // pred_region
          %s1172 = smul.u32 2, %s28
          %s1174 = ssub.s32 256, 256
          %1175 = vsyncadd %s1165, %s1174
          %s1176 = smul.addr %s27, 2
          %s1177 = sadd.s32 %s1172, %s1176
          %s1178 = smul.addr %s1177, 128
          %s1179 = scalar_lea.hbm %s7, %s1178
          %s1180 = sshll.u32 %s1168, 4
          %s1181 = int_to_ptr.vmem [resolvable:$true] %s1180
          %1186 = dma.vmem_to_hbm [thread:$0]  %s1181, 256, %s1179, %s1165, 128, 128, 8
        $region76: #{tpu_custom_call.1} parent=43 // pred_fallthru
          _
      $region44: #{tpu_custom_call.1} parent=5 // pred_fallthru
        _
      %p1187 = scmp.le.s32.totalorder 2, %s18
      // Predicated region
      $region77: #{tpu_custom_call.1} parent=5 // pred_check
        %p1188 = pneg %p1187
      $region78: #{tpu_custom_call.1} parent=5 // pred_check_branch
        %1190 = sbr.rel (%p1188) target = $region80
      $region79: #{tpu_custom_call.1} parent=5 // pred_region
        %s1191 = ssub.s32 %s18, 2
        // Predicated region
        $region81: #{tpu_custom_call.1} parent=79 // pred_check
          %p1192 = pneg %p187
        $region82: #{tpu_custom_call.1} parent=79 // pred_check_branch
          %1194 = sbr.rel (%p1192) target = $region84
        $region83: #{tpu_custom_call.1} parent=79 // pred_region
          %s1195 = sand.u32 %s172, 1
          %s1196 = scalar_lea.sflag [#allocation6], %s1195
          %s1197 = sand.u32 %s172, 1
          %s1198 = smul.addr %s1197, 16
          %s1199 = scalar_lea.vmem [#allocation10], %s1198
          %1200 = dma.done %s1196, 256
        $region84: #{tpu_custom_call.1} parent=79 // pred_fallthru
          _
      $region80: #{tpu_custom_call.1} parent=5 // pred_fallthru
        _
    $region6: #{tpu_custom_call.1} parent=1 // loop_footer
      %s22 = sadd.s32 1, %s18
    $region7: #{tpu_custom_call.1} parent=1 // loop_footer_branch
      %17 = sbr.rel target = $region3
    $region8: #{tpu_custom_call.1} parent=1 // loop_exit
      _
    %1201 = vsyncpa [#allocation5], 1
    %s1202 = scalar_lea.sflag [#allocation5], 1
    %1203 = vsyncpa %s1202, 1
    %1204 = vsyncpa [#allocation8], 1
    %1205 = vsyncpa [#allocation6], 1
    %s1206 = scalar_lea.sflag [#allocation6], 1
    %1207 = vsyncpa %s1206, 1
  %1208 = vsyncmov [#allocation3]
  %s1209 = vpop.sfrf %1208
  %p1210 = scmp.eq.s32.totalorder %s1209, 0
  %p1211 = pneg %p1210
  %1213 = shalt.err (%p1211)
  %s1214 = scalar_lea.sflag [#allocation3], 1
  %1215 = vsyncmov %s1214
  %s1216 = vpop.sfrf %1215
  %p1217 = scmp.eq.s32.totalorder %s1216, 0
  %p1218 = pneg %p1217
  %1220 = shalt.err (%p1218)

</llo_original>
